<compile_context>
chip_gen: v6e
topology: v6e:2x2x1
jax: 0.10.0
libtpu: 0.0.40
codegen_flags: <defaults>
</compile_context>

<pallas_src>
import math

import jax
import jax.numpy as jnp
from jax.experimental import pallas as pl
from jax.experimental.pallas import tpu as pltpu

# ----------------------------- config --------------------------------------
B = 2            # batch
S = 16           # sequence length
D = 128          # embedding_size (multiple of 128 -> lane-dense)
F = 256          # ffn_size
N_HEADS = 4      # heads, d_head = 32
NEG_INF = -1e30  # python float (never captured as a traced constant)
LN_EPS = 1e-5


# ----------------------------- kernel helpers ------------------------------
def _softmax_rows(s):
    m = jnp.max(s, axis=-1, keepdims=True)
    e = jnp.exp(s - m)
    # reciprocal on the EUP slot instead of a VPU divide
    return e * pl.reciprocal(jnp.sum(e, axis=-1, keepdims=True), approx=True)


def _layer_norm(x, g, b):
    # fused reductions: issue sum(x) and sum(x*x) together, var = E[x^2]-mu^2
    inv_d = 1.0 / x.shape[-1]
    mu = jnp.sum(x, axis=-1, keepdims=True) * inv_d
    ex2 = jnp.sum(x * x, axis=-1, keepdims=True) * inv_d
    var = ex2 - mu * mu
    return (x - mu) * jax.lax.rsqrt(var + LN_EPS) * g + b


# ----------------------------- fused kernel --------------------------------
def _encoder_layer_kernel(x_ref, bias_ref, rmask_ref, w_qkvo_ref, w1_ref,
                          w2_ref, vec_ref, out_ref):
    x = x_ref[...]                    # (R, D), R = B*S (batch folded into rows)
    bias = bias_ref[...]              # (R, R) additive: 0 allowed / -1e30 not
    rmask = rmask_ref[...]            # (R, D) output row mask (lane-broadcast)

    d = x.shape[-1]
    dph = d // N_HEADS
    f = w1_ref.shape[1]

    w = w_qkvo_ref[...]               # (D, 4D) = [Wq/scale | Wk | Wv | Wo]
    vec = vec_ref[...]                # (8, >=4D) packed biases / LN params

    b_qkv = vec[0:1, :3 * d]          # [bq/scale | bk | bv]
    b_o = vec[0:1, 3 * d:4 * d]
    b_f1 = vec[1:2, :f]
    b_f2 = vec[2:3, :d]
    ln1_g, ln1_b = vec[3:4, :d], vec[4:5, :d]
    ln2_g, ln2_b = vec[5:6, :d], vec[6:7, :d]

    # fused QKV projection over all B*S rows (single 3D-wide MXU matmul)
    qkv = jnp.dot(x, w[:, :3 * d], preferred_element_type=jnp.float32) + b_qkv
    q, k, v = qkv[:, :d], qkv[:, d:2 * d], qkv[:, 2 * d:3 * d]

    # per-head attention with Wo folded in; no concat, no separate out-proj
    acc = None
    for h in range(N_HEADS):          # static unrolled head loop
        lo = h * dph
        qh = q[:, lo:lo + dph]
        kh = k[:, lo:lo + dph]
        vh = v[:, lo:lo + dph]
        # q·k^T without materializing a transpose
        s = jax.lax.dot_general(qh, kh, (((1,), (1,)), ((), ())),
                                preferred_element_type=jnp.float32)  # (R, R)
        p = _softmax_rows(s + bias)
        ctx = jnp.dot(p, vh, preferred_element_type=jnp.float32)     # (R, dph)
        contrib = jnp.dot(ctx, w[lo:lo + dph, 3 * d:4 * d],
                          preferred_element_type=jnp.float32)        # (R, D)
        acc = contrib if acc is None else acc + contrib
    attn = acc + b_o

    h1 = _layer_norm(x + attn, ln1_g, ln1_b)

    ff = jnp.dot(h1, w1_ref[...], preferred_element_type=jnp.float32) + b_f1
    ff = jnp.maximum(ff, 0.0)
    ff = jnp.dot(ff, w2_ref[...], preferred_element_type=jnp.float32) + b_f2

    h2 = _layer_norm(h1 + ff, ln2_g, ln2_b)
    out_ref[...] = h2 * rmask         # zero padded rows (lane-dense store)


# ----------------------------- pallas wrapper ------------------------------
def encoder_layer_pallas(x, mask, packed):
    bsz, seq, dim = x.shape
    rows = bsz * seq
    xf = x.reshape(rows, dim)

    # Additive attention bias over the folded row axis:
    #   bias[b*S+i, b2*S+j] = 0  if b == b2 and key (b2, j) is valid
    #                       = -1e30 otherwise (cross-batch or padded key)
    key_valid = mask.astype(jnp.float32)                         # (B, S)
    same_batch = jnp.eye(bsz, dtype=jnp.float32)                 # (B, B)
    allow = same_batch[:, None, :, None] * key_valid[None, None, :, :]
    allow = jnp.broadcast_to(allow, (bsz, seq, bsz, seq)).reshape(rows, rows)
    bias = (allow - 1.0) * (-NEG_INF)

    # lane-dense output row mask (replaces the old 1-lane (B, S, 1) input)
    rmask = jnp.broadcast_to(
        mask.astype(jnp.float32).reshape(rows, 1), (rows, dim))

    def full(shape):
        n = len(shape)
        return pl.BlockSpec(shape, lambda i: (0,) * n)

    out = pl.pallas_call(
        _encoder_layer_kernel,
        out_shape=jax.ShapeDtypeStruct((rows, dim), jnp.float32),
        grid=(1,),
        in_specs=[
            full((rows, dim)),             # x (batch folded)
            full((rows, rows)),            # additive attention bias
            full((rows, dim)),             # output row mask
            full(packed["w_qkvo"].shape),
            full(packed["w1"].shape),
            full(packed["w2"].shape),
            full(packed["vec"].shape),
        ],
        out_specs=full((rows, dim)),
        compiler_params=pltpu.CompilerParams(
            dimension_semantics=("arbitrary",)),
    )(xf, bias, rmask, packed["w_qkvo"], packed["w1"], packed["w2"],
      packed["vec"])
    return out.reshape(bsz, seq, dim)


# ----------------------------- params --------------------------------------
def init_params(key):
    ks = jax.random.split(key, 12)

    def xavier(k, shape):
        std = math.sqrt(2.0 / (shape[0] + shape[1]))
        return (std * jax.random.normal(k, shape)).astype(jnp.float32)

    def bias(k, n):
        return (0.02 * jax.random.normal(k, (n,))).astype(jnp.float32)

    return {
        "wq": xavier(ks[0], (D, D)), "wk": xavier(ks[1], (D, D)),
        "wv": xavier(ks[2], (D, D)), "wo": xavier(ks[3], (D, D)),
        "bq": bias(ks[4], D), "bk": bias(ks[5], D),
        "bv": bias(ks[6], D), "bo": bias(ks[7], D),
        "w1": xavier(ks[8], (D, F)), "b1": bias(ks[9], F),
        "w2": xavier(ks[10], (F, D)), "b2": bias(ks[11], D),
        "ln1_g": jnp.ones((D,), jnp.float32),
        "ln1_b": jnp.zeros((D,), jnp.float32),
        "ln2_g": jnp.ones((D,), jnp.float32),
        "ln2_b": jnp.zeros((D,), jnp.float32),
    }


def pack_params(p):
    """Fuse weights into slabs; fold 1/sqrt(d_head) into the Q projection."""
    scale = math.sqrt(D // N_HEADS)
    w_qkvo = jnp.concatenate([p["wq"] / scale, p["wk"], p["wv"], p["wo"]],
                             axis=1)                       # (D, 4D)
    width = max(4 * D, F)
    vec = jnp.zeros((8, width), jnp.float32)
    vec = vec.at[0, :D].set(p["bq"] / scale)
    vec = vec.at[0, D:2 * D].set(p["bk"])
    vec = vec.at[0, 2 * D:3 * D].set(p["bv"])
    vec = vec.at[0, 3 * D:4 * D].set(p["bo"])
    vec = vec.at[1, :F].set(p["b1"])
    vec = vec.at[2, :D].set(p["b2"])
    vec = vec.at[3, :D].set(p["ln1_g"])
    vec = vec.at[4, :D].set(p["ln1_b"])
    vec = vec.at[5, :D].set(p["ln2_g"])
    vec = vec.at[6, :D].set(p["ln2_b"])
    return {"w_qkvo": w_qkvo, "w1": p["w1"], "w2": p["w2"], "vec": vec}


# ----------------------------- pure-JAX reference --------------------------
def reference_forward(x, mask, p):
    hp = jax.lax.Precision.HIGHEST
    dph = D // N_HEADS
    scale = math.sqrt(dph)

    def linear(t, w, b):
        return jnp.einsum("bsd,df->bsf", t, w, precision=hp) + b

    def ln(t, g, b):
        mu = jnp.mean(t, axis=-1, keepdims=True)
        tc = t - mu
        var = jnp.mean(tc * tc, axis=-1, keepdims=True)
        return tc / jnp.sqrt(var + LN_EPS) * g + b

    def heads(t):
        bsz, seq, _ = t.shape
        return t.reshape(bsz, seq, N_HEADS, dph).transpose(0, 2, 1, 3)

    q = heads(linear(x, p["wq"], p["bq"]) / scale)
    k = heads(linear(x, p["wk"], p["bk"]))
    v = heads(linear(x, p["wv"], p["bv"]))
    s = jnp.einsum("bhqd,bhkd->bhqk", q, k, precision=hp)
    s = jnp.where(mask[:, None, None, :] > 0.5, s, NEG_INF)
    a = jnp.einsum("bhqk,bhkd->bhqd", jax.nn.softmax(s, axis=-1), v,
                   precision=hp)
    bsz, _, seq, _ = a.shape
    a = a.transpose(0, 2, 1, 3).reshape(bsz, seq, D)
    a = linear(a, p["wo"], p["bo"])

    h1 = ln(x + a, p["ln1_g"], p["ln1_b"])
    ff = linear(jnp.maximum(linear(h1, p["w1"], p["b1"]), 0.0),
                p["w2"], p["b2"])
    h2 = ln(h1 + ff, p["ln2_g"], p["ln2_b"])
    return h2 * mask[..., None].astype(h2.dtype)


# ----------------------------- main -----------------------------------------
if __name__ == "__main__":
    root = jax.random.PRNGKey(0)
    k_param, k_x = jax.random.split(root)

    params = init_params(k_param)
    packed = pack_params(params)

    x = jax.random.normal(k_x, (B, S, D), dtype=jnp.float32)
    mask = jnp.ones((B, S), dtype=jnp.float32)
    mask = mask.at[0, S - 4:].set(0.0)        # pad the tail of sequence 0

    fwd = jax.jit(lambda xx, mm: encoder_layer_pallas(xx, mm, packed))
    out = jax.block_until_ready(fwd(x, mask))

    assert out.shape == (B, S, D) and out.dtype == jnp.float32

    ref = reference_forward(x, mask, params)
    err = float(jnp.max(jnp.abs(out - ref)))
    assert err < 3e-2, f"max |out - ref| = {err}"
    assert float(jnp.max(jnp.abs(out[0, S - 4:]))) == 0.0  # padded rows zeroed

    print("KERNEL_OK")
</pallas_src>

<mosaic_0001>
module attributes {stable_mosaic.version = 11 : i64} {
  func.func @_encoder_layer_kernel(%arg0: i32, %arg1: memref<32x128xf32, #tpu.memory_space<vmem>>, %arg2: memref<32x32xf32, #tpu.memory_space<vmem>>, %arg3: memref<32x128xf32, #tpu.memory_space<vmem>>, %arg4: memref<128x512xf32, #tpu.memory_space<vmem>>, %arg5: memref<128x256xf32, #tpu.memory_space<vmem>>, %arg6: memref<256x128xf32, #tpu.memory_space<vmem>>, %arg7: memref<8x512xf32, #tpu.memory_space<vmem>>, %arg8: memref<32x128xf32, #tpu.memory_space<vmem>>) attributes {dimension_semantics = [#tpu.dimension_semantics<arbitrary>], iteration_bounds = array<i64: 1>, scalar_prefetch = 0 : i64, scratch_operands = 0 : i64, tpu.core_type = #tpu.core_type<tc>, window_params = [{pipeline_mode = #tpu.pipeline_mode<synchronous>, transform_indices = @transform_0, window_bounds = array<i64: 32, 128>}, {pipeline_mode = #tpu.pipeline_mode<synchronous>, transform_indices = @transform_1, window_bounds = array<i64: 32, 32>}, {pipeline_mode = #tpu.pipeline_mode<synchronous>, transform_indices = @transform_2, window_bounds = array<i64: 32, 128>}, {pipeline_mode = #tpu.pipeline_mode<synchronous>, transform_indices = @transform_3, window_bounds = array<i64: 128, 512>}, {pipeline_mode = #tpu.pipeline_mode<synchronous>, transform_indices = @transform_4, window_bounds = array<i64: 128, 256>}, {pipeline_mode = #tpu.pipeline_mode<synchronous>, transform_indices = @transform_5, window_bounds = array<i64: 256, 128>}, {pipeline_mode = #tpu.pipeline_mode<synchronous>, transform_indices = @transform_6, window_bounds = array<i64: 8, 512>}, {pipeline_mode = #tpu.pipeline_mode<synchronous>, transform_indices = @transform_7, window_bounds = array<i64: 32, 128>}]} {
    %c0 = arith.constant 0 : index
    %c0_0 = arith.constant 0 : index
    %0 = vector.load %arg1[%c0, %c0_0] : memref<32x128xf32, #tpu.memory_space<vmem>>, vector<32x128xf32>
    %c0_1 = arith.constant 0 : index
    %c0_2 = arith.constant 0 : index
    %1 = vector.load %arg2[%c0_1, %c0_2] : memref<32x32xf32, #tpu.memory_space<vmem>>, vector<32x32xf32>
    %c0_3 = arith.constant 0 : index
    %c0_4 = arith.constant 0 : index
    %2 = vector.load %arg3[%c0_3, %c0_4] : memref<32x128xf32, #tpu.memory_space<vmem>>, vector<32x128xf32>
    %c0_5 = arith.constant 0 : index
    %c0_6 = arith.constant 0 : index
    %3 = vector.load %arg4[%c0_5, %c0_6] : memref<128x512xf32, #tpu.memory_space<vmem>>, vector<128x512xf32>
    %c0_7 = arith.constant 0 : index
    %c0_8 = arith.constant 0 : index
    %4 = vector.load %arg7[%c0_7, %c0_8] : memref<8x512xf32, #tpu.memory_space<vmem>>, vector<8x512xf32>
    %5 = vector.extract_strided_slice %4 {offsets = [0, 0], sizes = [1, 384], strides = [1, 1]} : vector<8x512xf32> to vector<1x384xf32>
    %6 = vector.extract_strided_slice %4 {offsets = [0, 384], sizes = [1, 128], strides = [1, 1]} : vector<8x512xf32> to vector<1x128xf32>
    %7 = vector.extract_strided_slice %4 {offsets = [1, 0], sizes = [1, 256], strides = [1, 1]} : vector<8x512xf32> to vector<1x256xf32>
    %8 = vector.extract_strided_slice %4 {offsets = [2, 0], sizes = [1, 128], strides = [1, 1]} : vector<8x512xf32> to vector<1x128xf32>
    %9 = vector.extract_strided_slice %4 {offsets = [3, 0], sizes = [1, 128], strides = [1, 1]} : vector<8x512xf32> to vector<1x128xf32>
    %10 = vector.extract_strided_slice %4 {offsets = [4, 0], sizes = [1, 128], strides = [1, 1]} : vector<8x512xf32> to vector<1x128xf32>
    %11 = vector.extract_strided_slice %4 {offsets = [5, 0], sizes = [1, 128], strides = [1, 1]} : vector<8x512xf32> to vector<1x128xf32>
    %12 = vector.extract_strided_slice %4 {offsets = [6, 0], sizes = [1, 128], strides = [1, 1]} : vector<8x512xf32> to vector<1x128xf32>
    %13 = vector.extract_strided_slice %3 {offsets = [0, 0], sizes = [128, 384], strides = [1, 1]} : vector<128x512xf32> to vector<128x384xf32>
    %cst = arith.constant dense<0.000000e+00> : vector<32x384xf32>
    %14 = tpu.matmul %0, %13, %cst {dimension_numbers = #tpu.dot_dimension_numbers<[1], [0], [0], [1], [0, 0, 1, 1], [], []>} : vector<32x128xf32>, vector<128x384xf32>, vector<32x384xf32> -> vector<32x384xf32>
    %15 = vector.broadcast %5 : vector<1x384xf32> to vector<32x384xf32>
    %16 = arith.addf %14, %15 : vector<32x384xf32>
    %17 = vector.extract_strided_slice %16 {offsets = [0, 0], sizes = [32, 128], strides = [1, 1]} : vector<32x384xf32> to vector<32x128xf32>
    %18 = vector.extract_strided_slice %16 {offsets = [0, 128], sizes = [32, 128], strides = [1, 1]} : vector<32x384xf32> to vector<32x128xf32>
    %19 = vector.extract_strided_slice %16 {offsets = [0, 256], sizes = [32, 128], strides = [1, 1]} : vector<32x384xf32> to vector<32x128xf32>
    %20 = vector.extract_strided_slice %17 {offsets = [0, 0], sizes = [32, 32], strides = [1, 1]} : vector<32x128xf32> to vector<32x32xf32>
    %21 = vector.extract_strided_slice %18 {offsets = [0, 0], sizes = [32, 32], strides = [1, 1]} : vector<32x128xf32> to vector<32x32xf32>
    %22 = vector.extract_strided_slice %19 {offsets = [0, 0], sizes = [32, 32], strides = [1, 1]} : vector<32x128xf32> to vector<32x32xf32>
    %cst_9 = arith.constant dense<0.000000e+00> : vector<32x32xf32>
    %23 = tpu.matmul %20, %21, %cst_9 {dimension_numbers = #tpu.dot_dimension_numbers<[1], [1], [0], [0], [0, 0, 1, 0], [], []>} : vector<32x32xf32>, vector<32x32xf32>, vector<32x32xf32> -> vector<32x32xf32>
    %24 = arith.addf %23, %1 : vector<32x32xf32>
    %cst_10 = arith.constant dense<0xFF800000> : vector<32xf32>
    %25 = vector.multi_reduction <maximumf>, %24, %cst_10 [1] : vector<32x32xf32> to vector<32xf32>
    %26 = vector.shape_cast %25 : vector<32xf32> to vector<32x1xf32>
    %27 = vector.broadcast %26 : vector<32x1xf32> to vector<32x32xf32>
    %28 = arith.subf %24, %27 : vector<32x32xf32>
    %29 = math.exp %28 : vector<32x32xf32>
    %cst_11 = arith.constant dense<0.000000e+00> : vector<32xf32>
    %30 = vector.multi_reduction <add>, %29, %cst_11 [1] : vector<32x32xf32> to vector<32xf32>
    %31 = vector.shape_cast %30 : vector<32xf32> to vector<32x1xf32>
    %32 = tpu.reciprocal %31 {approx = true} : vector<32x1xf32> -> vector<32x1xf32>
    %33 = vector.broadcast %32 : vector<32x1xf32> to vector<32x32xf32>
    %34 = arith.mulf %29, %33 : vector<32x32xf32>
    %cst_12 = arith.constant dense<0.000000e+00> : vector<32x32xf32>
    %35 = tpu.matmul %34, %22, %cst_12 {dimension_numbers = #tpu.dot_dimension_numbers<[1], [0], [0], [1], [0, 0, 1, 1], [], []>} : vector<32x32xf32>, vector<32x32xf32>, vector<32x32xf32> -> vector<32x32xf32>
    %36 = vector.extract_strided_slice %3 {offsets = [0, 384], sizes = [32, 128], strides = [1, 1]} : vector<128x512xf32> to vector<32x128xf32>
    %cst_13 = arith.constant dense<0.000000e+00> : vector<32x128xf32>
    %37 = tpu.matmul %35, %36, %cst_13 {dimension_numbers = #tpu.dot_dimension_numbers<[1], [0], [0], [1], [0, 0, 1, 1], [], []>} : vector<32x32xf32>, vector<32x128xf32>, vector<32x128xf32> -> vector<32x128xf32>
    %38 = vector.extract_strided_slice %17 {offsets = [0, 32], sizes = [32, 32], strides = [1, 1]} : vector<32x128xf32> to vector<32x32xf32>
    %39 = vector.extract_strided_slice %18 {offsets = [0, 32], sizes = [32, 32], strides = [1, 1]} : vector<32x128xf32> to vector<32x32xf32>
    %40 = vector.extract_strided_slice %19 {offsets = [0, 32], sizes = [32, 32], strides = [1, 1]} : vector<32x128xf32> to vector<32x32xf32>
    %cst_14 = arith.constant dense<0.000000e+00> : vector<32x32xf32>
    %41 = tpu.matmul %38, %39, %cst_14 {dimension_numbers = #tpu.dot_dimension_numbers<[1], [1], [0], [0], [0, 0, 1, 0], [], []>} : vector<32x32xf32>, vector<32x32xf32>, vector<32x32xf32> -> vector<32x32xf32>
    %42 = arith.addf %41, %1 : vector<32x32xf32>
    %cst_15 = arith.constant dense<0xFF800000> : vector<32xf32>
    %43 = vector.multi_reduction <maximumf>, %42, %cst_15 [1] : vector<32x32xf32> to vector<32xf32>
    %44 = vector.shape_cast %43 : vector<32xf32> to vector<32x1xf32>
    %45 = vector.broadcast %44 : vector<32x1xf32> to vector<32x32xf32>
    %46 = arith.subf %42, %45 : vector<32x32xf32>
    %47 = math.exp %46 : vector<32x32xf32>
    %cst_16 = arith.constant dense<0.000000e+00> : vector<32xf32>
    %48 = vector.multi_reduction <add>, %47, %cst_16 [1] : vector<32x32xf32> to vector<32xf32>
    %49 = vector.shape_cast %48 : vector<32xf32> to vector<32x1xf32>
    %50 = tpu.reciprocal %49 {approx = true} : vector<32x1xf32> -> vector<32x1xf32>
    %51 = vector.broadcast %50 : vector<32x1xf32> to vector<32x32xf32>
    %52 = arith.mulf %47, %51 : vector<32x32xf32>
    %cst_17 = arith.constant dense<0.000000e+00> : vector<32x32xf32>
    %53 = tpu.matmul %52, %40, %cst_17 {dimension_numbers = #tpu.dot_dimension_numbers<[1], [0], [0], [1], [0, 0, 1, 1], [], []>} : vector<32x32xf32>, vector<32x32xf32>, vector<32x32xf32> -> vector<32x32xf32>
    %54 = vector.extract_strided_slice %3 {offsets = [32, 384], sizes = [32, 128], strides = [1, 1]} : vector<128x512xf32> to vector<32x128xf32>
    %cst_18 = arith.constant dense<0.000000e+00> : vector<32x128xf32>
    %55 = tpu.matmul %53, %54, %cst_18 {dimension_numbers = #tpu.dot_dimension_numbers<[1], [0], [0], [1], [0, 0, 1, 1], [], []>} : vector<32x32xf32>, vector<32x128xf32>, vector<32x128xf32> -> vector<32x128xf32>
    %56 = arith.addf %37, %55 : vector<32x128xf32>
    %57 = vector.extract_strided_slice %17 {offsets = [0, 64], sizes = [32, 32], strides = [1, 1]} : vector<32x128xf32> to vector<32x32xf32>
    %58 = vector.extract_strided_slice %18 {offsets = [0, 64], sizes = [32, 32], strides = [1, 1]} : vector<32x128xf32> to vector<32x32xf32>
    %59 = vector.extract_strided_slice %19 {offsets = [0, 64], sizes = [32, 32], strides = [1, 1]} : vector<32x128xf32> to vector<32x32xf32>
    %cst_19 = arith.constant dense<0.000000e+00> : vector<32x32xf32>
    %60 = tpu.matmul %57, %58, %cst_19 {dimension_numbers = #tpu.dot_dimension_numbers<[1], [1], [0], [0], [0, 0, 1, 0], [], []>} : vector<32x32xf32>, vector<32x32xf32>, vector<32x32xf32> -> vector<32x32xf32>
    %61 = arith.addf %60, %1 : vector<32x32xf32>
    %cst_20 = arith.constant dense<0xFF800000> : vector<32xf32>
    %62 = vector.multi_reduction <maximumf>, %61, %cst_20 [1] : vector<32x32xf32> to vector<32xf32>
    %63 = vector.shape_cast %62 : vector<32xf32> to vector<32x1xf32>
    %64 = vector.broadcast %63 : vector<32x1xf32> to vector<32x32xf32>
    %65 = arith.subf %61, %64 : vector<32x32xf32>
    %66 = math.exp %65 : vector<32x32xf32>
    %cst_21 = arith.constant dense<0.000000e+00> : vector<32xf32>
    %67 = vector.multi_reduction <add>, %66, %cst_21 [1] : vector<32x32xf32> to vector<32xf32>
    %68 = vector.shape_cast %67 : vector<32xf32> to vector<32x1xf32>
    %69 = tpu.reciprocal %68 {approx = true} : vector<32x1xf32> -> vector<32x1xf32>
    %70 = vector.broadcast %69 : vector<32x1xf32> to vector<32x32xf32>
    %71 = arith.mulf %66, %70 : vector<32x32xf32>
    %cst_22 = arith.constant dense<0.000000e+00> : vector<32x32xf32>
    %72 = tpu.matmul %71, %59, %cst_22 {dimension_numbers = #tpu.dot_dimension_numbers<[1], [0], [0], [1], [0, 0, 1, 1], [], []>} : vector<32x32xf32>, vector<32x32xf32>, vector<32x32xf32> -> vector<32x32xf32>
    %73 = vector.extract_strided_slice %3 {offsets = [64, 384], sizes = [32, 128], strides = [1, 1]} : vector<128x512xf32> to vector<32x128xf32>
    %cst_23 = arith.constant dense<0.000000e+00> : vector<32x128xf32>
    %74 = tpu.matmul %72, %73, %cst_23 {dimension_numbers = #tpu.dot_dimension_numbers<[1], [0], [0], [1], [0, 0, 1, 1], [], []>} : vector<32x32xf32>, vector<32x128xf32>, vector<32x128xf32> -> vector<32x128xf32>
    %75 = arith.addf %56, %74 : vector<32x128xf32>
    %76 = vector.extract_strided_slice %17 {offsets = [0, 96], sizes = [32, 32], strides = [1, 1]} : vector<32x128xf32> to vector<32x32xf32>
    %77 = vector.extract_strided_slice %18 {offsets = [0, 96], sizes = [32, 32], strides = [1, 1]} : vector<32x128xf32> to vector<32x32xf32>
    %78 = vector.extract_strided_slice %19 {offsets = [0, 96], sizes = [32, 32], strides = [1, 1]} : vector<32x128xf32> to vector<32x32xf32>
    %cst_24 = arith.constant dense<0.000000e+00> : vector<32x32xf32>
    %79 = tpu.matmul %76, %77, %cst_24 {dimension_numbers = #tpu.dot_dimension_numbers<[1], [1], [0], [0], [0, 0, 1, 0], [], []>} : vector<32x32xf32>, vector<32x32xf32>, vector<32x32xf32> -> vector<32x32xf32>
    %80 = arith.addf %79, %1 : vector<32x32xf32>
    %cst_25 = arith.constant dense<0xFF800000> : vector<32xf32>
    %81 = vector.multi_reduction <maximumf>, %80, %cst_25 [1] : vector<32x32xf32> to vector<32xf32>
    %82 = vector.shape_cast %81 : vector<32xf32> to vector<32x1xf32>
    %83 = vector.broadcast %82 : vector<32x1xf32> to vector<32x32xf32>
    %84 = arith.subf %80, %83 : vector<32x32xf32>
    %85 = math.exp %84 : vector<32x32xf32>
    %cst_26 = arith.constant dense<0.000000e+00> : vector<32xf32>
    %86 = vector.multi_reduction <add>, %85, %cst_26 [1] : vector<32x32xf32> to vector<32xf32>
    %87 = vector.shape_cast %86 : vector<32xf32> to vector<32x1xf32>
    %88 = tpu.reciprocal %87 {approx = true} : vector<32x1xf32> -> vector<32x1xf32>
    %89 = vector.broadcast %88 : vector<32x1xf32> to vector<32x32xf32>
    %90 = arith.mulf %85, %89 : vector<32x32xf32>
    %cst_27 = arith.constant dense<0.000000e+00> : vector<32x32xf32>
    %91 = tpu.matmul %90, %78, %cst_27 {dimension_numbers = #tpu.dot_dimension_numbers<[1], [0], [0], [1], [0, 0, 1, 1], [], []>} : vector<32x32xf32>, vector<32x32xf32>, vector<32x32xf32> -> vector<32x32xf32>
    %92 = vector.extract_strided_slice %3 {offsets = [96, 384], sizes = [32, 128], strides = [1, 1]} : vector<128x512xf32> to vector<32x128xf32>
    %cst_28 = arith.constant dense<0.000000e+00> : vector<32x128xf32>
    %93 = tpu.matmul %91, %92, %cst_28 {dimension_numbers = #tpu.dot_dimension_numbers<[1], [0], [0], [1], [0, 0, 1, 1], [], []>} : vector<32x32xf32>, vector<32x128xf32>, vector<32x128xf32> -> vector<32x128xf32>
    %94 = arith.addf %75, %93 : vector<32x128xf32>
    %95 = vector.broadcast %6 : vector<1x128xf32> to vector<32x128xf32>
    %96 = arith.addf %94, %95 : vector<32x128xf32>
    %97 = arith.addf %0, %96 : vector<32x128xf32>
    %cst_29 = arith.constant dense<0.000000e+00> : vector<32xf32>
    %98 = vector.multi_reduction <add>, %97, %cst_29 [1] : vector<32x128xf32> to vector<32xf32>
    %99 = vector.shape_cast %98 : vector<32xf32> to vector<32x1xf32>
    %cst_30 = arith.constant 7.812500e-03 : f32
    %100 = vector.broadcast %cst_30 : f32 to vector<32x1xf32>
    %101 = arith.mulf %99, %100 : vector<32x1xf32>
    %102 = arith.mulf %97, %97 : vector<32x128xf32>
    %cst_31 = arith.constant dense<0.000000e+00> : vector<32xf32>
    %103 = vector.multi_reduction <add>, %102, %cst_31 [1] : vector<32x128xf32> to vector<32xf32>
    %104 = vector.shape_cast %103 : vector<32xf32> to vector<32x1xf32>
    %cst_32 = arith.constant 7.812500e-03 : f32
    %105 = vector.broadcast %cst_32 : f32 to vector<32x1xf32>
    %106 = arith.mulf %104, %105 : vector<32x1xf32>
    %107 = arith.mulf %101, %101 : vector<32x1xf32>
    %108 = arith.subf %106, %107 : vector<32x1xf32>
    %109 = vector.broadcast %101 : vector<32x1xf32> to vector<32x128xf32>
    %110 = arith.subf %97, %109 : vector<32x128xf32>
    %cst_33 = arith.constant 9.99999974E-6 : f32
    %111 = vector.broadcast %cst_33 : f32 to vector<32x1xf32>
    %112 = arith.addf %108, %111 : vector<32x1xf32>
    %113 = math.rsqrt %112 : vector<32x1xf32>
    %114 = vector.broadcast %113 : vector<32x1xf32> to vector<32x128xf32>
    %115 = arith.mulf %110, %114 : vector<32x128xf32>
    %116 = vector.broadcast %9 : vector<1x128xf32> to vector<32x128xf32>
    %117 = arith.mulf %115, %116 : vector<32x128xf32>
    %118 = vector.broadcast %10 : vector<1x128xf32> to vector<32x128xf32>
    %119 = arith.addf %117, %118 : vector<32x128xf32>
    %c0_34 = arith.constant 0 : index
    %c0_35 = arith.constant 0 : index
    %120 = vector.load %arg5[%c0_34, %c0_35] : memref<128x256xf32, #tpu.memory_space<vmem>>, vector<128x256xf32>
    %cst_36 = arith.constant dense<0.000000e+00> : vector<32x256xf32>
    %121 = tpu.matmul %119, %120, %cst_36 {dimension_numbers = #tpu.dot_dimension_numbers<[1], [0], [0], [1], [0, 0, 1, 1], [], []>} : vector<32x128xf32>, vector<128x256xf32>, vector<32x256xf32> -> vector<32x256xf32>
    %122 = vector.broadcast %7 : vector<1x256xf32> to vector<32x256xf32>
    %123 = arith.addf %121, %122 : vector<32x256xf32>
    %cst_37 = arith.constant 0.000000e+00 : f32
    %124 = vector.broadcast %cst_37 : f32 to vector<32x256xf32>
    %125 = arith.maximumf %123, %124 : vector<32x256xf32>
    %c0_38 = arith.constant 0 : index
    %c0_39 = arith.constant 0 : index
    %126 = vector.load %arg6[%c0_38, %c0_39] : memref<256x128xf32, #tpu.memory_space<vmem>>, vector<256x128xf32>
    %cst_40 = arith.constant dense<0.000000e+00> : vector<32x128xf32>
    %127 = tpu.matmul %125, %126, %cst_40 {dimension_numbers = #tpu.dot_dimension_numbers<[1], [0], [0], [1], [0, 0, 1, 1], [], []>} : vector<32x256xf32>, vector<256x128xf32>, vector<32x128xf32> -> vector<32x128xf32>
    %128 = vector.broadcast %8 : vector<1x128xf32> to vector<32x128xf32>
    %129 = arith.addf %127, %128 : vector<32x128xf32>
    %130 = arith.addf %119, %129 : vector<32x128xf32>
    %cst_41 = arith.constant dense<0.000000e+00> : vector<32xf32>
    %131 = vector.multi_reduction <add>, %130, %cst_41 [1] : vector<32x128xf32> to vector<32xf32>
    %132 = vector.shape_cast %131 : vector<32xf32> to vector<32x1xf32>
    %cst_42 = arith.constant 7.812500e-03 : f32
    %133 = vector.broadcast %cst_42 : f32 to vector<32x1xf32>
    %134 = arith.mulf %132, %133 : vector<32x1xf32>
    %135 = arith.mulf %130, %130 : vector<32x128xf32>
    %cst_43 = arith.constant dense<0.000000e+00> : vector<32xf32>
    %136 = vector.multi_reduction <add>, %135, %cst_43 [1] : vector<32x128xf32> to vector<32xf32>
    %137 = vector.shape_cast %136 : vector<32xf32> to vector<32x1xf32>
    %cst_44 = arith.constant 7.812500e-03 : f32
    %138 = vector.broadcast %cst_44 : f32 to vector<32x1xf32>
    %139 = arith.mulf %137, %138 : vector<32x1xf32>
    %140 = arith.mulf %134, %134 : vector<32x1xf32>
    %141 = arith.subf %139, %140 : vector<32x1xf32>
    %142 = vector.broadcast %134 : vector<32x1xf32> to vector<32x128xf32>
    %143 = arith.subf %130, %142 : vector<32x128xf32>
    %cst_45 = arith.constant 9.99999974E-6 : f32
    %144 = vector.broadcast %cst_45 : f32 to vector<32x1xf32>
    %145 = arith.addf %141, %144 : vector<32x1xf32>
    %146 = math.rsqrt %145 : vector<32x1xf32>
    %147 = vector.broadcast %146 : vector<32x1xf32> to vector<32x128xf32>
    %148 = arith.mulf %143, %147 : vector<32x128xf32>
    %149 = vector.broadcast %11 : vector<1x128xf32> to vector<32x128xf32>
    %150 = arith.mulf %148, %149 : vector<32x128xf32>
    %151 = vector.broadcast %12 : vector<1x128xf32> to vector<32x128xf32>
    %152 = arith.addf %150, %151 : vector<32x128xf32>
    %153 = arith.mulf %152, %2 : vector<32x128xf32>
    %c0_46 = arith.constant 0 : index
    %c0_47 = arith.constant 0 : index
    %154 = vector.load %arg8[%c0_46, %c0_47] : memref<32x128xf32, #tpu.memory_space<vmem>>, vector<32x128xf32>
    tpu.vector_store %arg8[%c0_46, %c0_47], %153 {strides = array<i32>} : memref<32x128xf32, #tpu.memory_space<vmem>>, vector<32x128xf32>,
    return
  }
  func.func @transform_0(%arg0: i32) -> (i32, i32) {
    %c0_i32 = arith.constant 0 : i32
    %c0_i32_0 = arith.constant 0 : i32
    %c0_i32_1 = arith.constant 0 : i32
    return %c0_i32, %c0_i32_0 : i32, i32
  }
  func.func @transform_1(%arg0: i32) -> (i32, i32) {
    %c0_i32 = arith.constant 0 : i32
    %c0_i32_0 = arith.constant 0 : i32
    %c0_i32_1 = arith.constant 0 : i32
    return %c0_i32, %c0_i32_0 : i32, i32
  }
  func.func @transform_2(%arg0: i32) -> (i32, i32) {
    %c0_i32 = arith.constant 0 : i32
    %c0_i32_0 = arith.constant 0 : i32
    %c0_i32_1 = arith.constant 0 : i32
    return %c0_i32, %c0_i32_0 : i32, i32
  }
  func.func @transform_3(%arg0: i32) -> (i32, i32) {
    %c0_i32 = arith.constant 0 : i32
    %c0_i32_0 = arith.constant 0 : i32
    %c0_i32_1 = arith.constant 0 : i32
    return %c0_i32, %c0_i32_0 : i32, i32
  }
  func.func @transform_4(%arg0: i32) -> (i32, i32) {
    %c0_i32 = arith.constant 0 : i32
    %c0_i32_0 = arith.constant 0 : i32
    %c0_i32_1 = arith.constant 0 : i32
    return %c0_i32, %c0_i32_0 : i32, i32
  }
  func.func @transform_5(%arg0: i32) -> (i32, i32) {
    %c0_i32 = arith.constant 0 : i32
    %c0_i32_0 = arith.constant 0 : i32
    %c0_i32_1 = arith.constant 0 : i32
    return %c0_i32, %c0_i32_0 : i32, i32
  }
  func.func @transform_6(%arg0: i32) -> (i32, i32) {
    %c0_i32 = arith.constant 0 : i32
    %c0_i32_0 = arith.constant 0 : i32
    %c0_i32_1 = arith.constant 0 : i32
    return %c0_i32, %c0_i32_0 : i32, i32
  }
  func.func @transform_7(%arg0: i32) -> (i32, i32) {
    %c0_i32 = arith.constant 0 : i32
    %c0_i32_0 = arith.constant 0 : i32
    %c0_i32_1 = arith.constant 0 : i32
    return %c0_i32, %c0_i32_0 : i32, i32
  }
}

</mosaic_0001>

<llo_original>
// kernel: _lambda_.1
$region0: #{_lambda_.1}
  #allocation0 [shape = 'u32[]', space=smem, size = 0x4, offset = 0x4, fixed_abs, tag = 'smem constant byte address 0x4 - core index']
  #allocation1 [shape = 'u32[144,128]{1,0:T(1,128)}', space=vmem, size = 0x12000, scoped, tag = 'internal scratch']
  %s0 = inlined_call_operand.vmem [shape: f32[32,128], index: 0, kind: input, shape index: {}]
  %s1 = inlined_call_operand.vmem [shape: f32[32,32], index: 1, kind: input, shape index: {}]
  %s2 = inlined_call_operand.vmem [shape: f32[32,128], index: 2, kind: input, shape index: {}]
  %s3 = inlined_call_operand.hbm [shape: f32[128,512], index: 3, kind: input, shape index: {}]
  %s4 = inlined_call_operand.hbm [shape: f32[128,256], index: 4, kind: input, shape index: {}]
  %s5 = inlined_call_operand.hbm [shape: f32[256,128], index: 5, kind: input, shape index: {}]
  %s6 = inlined_call_operand.vmem [shape: f32[8,512], index: 6, kind: input, shape index: {}]
  %s7 = inlined_call_operand.hbm [shape: f32[32,128], index: 7, kind: output, shape index: {}]
  %s8 = sld [smem:[#allocation0]]
  $region50: #{_lambda_.1} parent=0
    _
  %s10 = ssub.s32 1, %s8
  %s11 = scalar_select 0, %s10, %s8
  $region1: #{_lambda_.1} parent=0
    #allocation2 [shape = 'u8[262144]{0}', space=vmem, size = 0x40000, scoped, tag = 'input window, operand 3, single buffered']
    #allocation3 [shape = 's32[1]{0}', space=sflag, size = 0x4, scoped, tag = 'scoped memory for _lambda_.1']
    #allocation4 [shape = 's32[1]{0}', space=sflag, size = 0x4, scoped, tag = 'scoped memory for _lambda_.1']
    #allocation5 [shape = 'u8[131072]{0}', space=vmem, size = 0x20000, scoped, tag = 'input window, operand 4, single buffered']
    #allocation6 [shape = 's32[1]{0}', space=sflag, size = 0x4, scoped, tag = 'scoped memory for _lambda_.1']
    #allocation7 [shape = 'u8[131072]{0}', space=vmem, size = 0x20000, scoped, tag = 'input window, operand 5, single buffered']
    #allocation8 [shape = 'u8[16384]{0}', space=vmem, size = 0x4000, scoped, tag = 'output window, operand 0, single buffered']
    %12 = vsyncpa [#allocation3], 0
    %13 = vsyncpa [#allocation6], 0
    %14 = vsyncpa [#allocation4], 0
    // Predicated region
    $region2: #{_lambda_.1} parent=1 // pred_check
      _
    $region3: #{_lambda_.1} parent=1 // pred_check_branch
      %16 = sbr.rel (0) target = $region5
    $region4: #{_lambda_.1} parent=1 // pred_region
      _
    $region5: #{_lambda_.1} parent=1 // pred_fallthru
      _
    // Predicated region
    $region6: #{_lambda_.1} parent=1 // pred_check
      _
    $region7: #{_lambda_.1} parent=1 // pred_check_branch
      %18 = sbr.rel (0) target = $region9
    $region8: #{_lambda_.1} parent=1 // pred_region
      _
    $region9: #{_lambda_.1} parent=1 // pred_fallthru
      _
    // Predicated region
    $region10: #{_lambda_.1} parent=1 // pred_check
      _
    $region11: #{_lambda_.1} parent=1 // pred_check_branch
      %20 = sbr.rel (0) target = $region13
    $region12: #{_lambda_.1} parent=1 // pred_region
      _
    $region13: #{_lambda_.1} parent=1 // pred_fallthru
      _
    // Predicated region
    $region14: #{_lambda_.1} parent=1 // pred_check
      _
    $region15: #{_lambda_.1} parent=1 // pred_check_branch
      %22 = sbr.rel (0) target = $region17
    $region16: #{_lambda_.1} parent=1 // pred_region
      %s24 = ssub.s32 8192, 8192
      %25 = vsyncadd [#allocation3], %s24
      %s26 = sshll.u32 [#allocation2], 4
      %s27 = int_to_ptr.vmem [resolvable:$true] %s26
      %32 = dma.hbm_to_vmem [thread:$0]  %s3, 8192, %s27, [#allocation3], 512, 512, 32
    $region17: #{_lambda_.1} parent=1 // pred_fallthru
      _
    // Predicated region
    $region18: #{_lambda_.1} parent=1 // pred_check
      _
    $region19: #{_lambda_.1} parent=1 // pred_check_branch
      %34 = sbr.rel (0) target = $region21
    $region20: #{_lambda_.1} parent=1 // pred_region
      %s36 = ssub.s32 4096, 4096
      %37 = vsyncadd [#allocation6], %s36
      %s38 = sshll.u32 [#allocation5], 4
      %s39 = int_to_ptr.vmem [resolvable:$true] %s38
      %44 = dma.hbm_to_vmem [thread:$0]  %s4, 4096, %s39, [#allocation6], 256, 256, 16
    $region21: #{_lambda_.1} parent=1 // pred_fallthru
      _
    // Predicated region
    $region22: #{_lambda_.1} parent=1 // pred_check
      _
    $region23: #{_lambda_.1} parent=1 // pred_check_branch
      %46 = sbr.rel (0) target = $region25
    $region24: #{_lambda_.1} parent=1 // pred_region
      %s48 = ssub.s32 4096, 4096
      %49 = vsyncadd [#allocation6], %s48
      %s50 = sshll.u32 [#allocation7], 4
      %s51 = int_to_ptr.vmem [resolvable:$true] %s50
      %56 = dma.hbm_to_vmem [thread:$0]  %s5, 4096, %s51, [#allocation6], 128, 128, 8
    $region25: #{_lambda_.1} parent=1 // pred_fallthru
      _
    // Predicated region
    $region26: #{_lambda_.1} parent=1 // pred_check
      _
    $region27: #{_lambda_.1} parent=1 // pred_check_branch
      %58 = sbr.rel (0) target = $region29
    $region28: #{_lambda_.1} parent=1 // pred_region
      _
    $region29: #{_lambda_.1} parent=1 // pred_fallthru
      _
    // Predicated region
    $region30: #{_lambda_.1} parent=1 // pred_check
      _
    $region31: #{_lambda_.1} parent=1 // pred_check_branch
      %60 = sbr.rel (0) target = $region33
    $region32: #{_lambda_.1} parent=1 // pred_region
      %61 = dma.done [#allocation3], 8192
    $region33: #{_lambda_.1} parent=1 // pred_fallthru
      _
    // Predicated region
    $region34: #{_lambda_.1} parent=1 // pred_check
      _
    $region35: #{_lambda_.1} parent=1 // pred_check_branch
      %63 = sbr.rel (0) target = $region37
    $region36: #{_lambda_.1} parent=1 // pred_region
      %64 = dma.done [#allocation6], 4096
    $region37: #{_lambda_.1} parent=1 // pred_fallthru
      _
    // Predicated region
    $region38: #{_lambda_.1} parent=1 // pred_check
      _
    $region39: #{_lambda_.1} parent=1 // pred_check_branch
      %66 = sbr.rel (0) target = $region41
    $region40: #{_lambda_.1} parent=1 // pred_region
      %67 = dma.done [#allocation6], 4096
    $region41: #{_lambda_.1} parent=1 // pred_fallthru
      _
    %v68 = vld [vmem:[%s0] sm:$0xff]
    %v69 = vld [vmem:[%s0 + $0x8] sm:$0xff]
    %v70 = vld [vmem:[%s0 + $0x10] sm:$0xff]
    %v71 = vld [vmem:[%s0 + $0x18] sm:$0xff]
    %v72 = vld [vmem:[%s1] sm:$0xff]
    %v73 = vld [vmem:[%s1 + $0x8] sm:$0xff]
    %v74 = vld [vmem:[%s1 + $0x10] sm:$0xff]
    %v75 = vld [vmem:[%s1 + $0x18] sm:$0xff]
    %v76 = vld [vmem:[%s2] sm:$0xff]
    %v77 = vld [vmem:[%s2 + $0x8] sm:$0xff]
    %v78 = vld [vmem:[%s2 + $0x10] sm:$0xff]
    %v79 = vld [vmem:[%s2 + $0x18] sm:$0xff]
    %v80 = vld [vmem:[#allocation2] sm:$0xff]
    %v81 = vld [vmem:[#allocation2 + $0x8] sm:$0xff]
    %v82 = vld [vmem:[#allocation2 + $0x10] sm:$0xff]
    %v83 = vld [vmem:[#allocation2 + $0x18] sm:$0xff]
    %v84 = vld [vmem:[#allocation2 + $0x20] sm:$0xff]
    %v85 = vld [vmem:[#allocation2 + $0x28] sm:$0xff]
    %v86 = vld [vmem:[#allocation2 + $0x30] sm:$0xff]
    %v87 = vld [vmem:[#allocation2 + $0x38] sm:$0xff]
    %v88 = vld [vmem:[#allocation2 + $0x40] sm:$0xff]
    %v89 = vld [vmem:[#allocation2 + $0x48] sm:$0xff]
    %v90 = vld [vmem:[#allocation2 + $0x50] sm:$0xff]
    %v91 = vld [vmem:[#allocation2 + $0x58] sm:$0xff]
    %v92 = vld [vmem:[#allocation2 + $0x60] sm:$0xff]
    %v93 = vld [vmem:[#allocation2 + $0x68] sm:$0xff]
    %v94 = vld [vmem:[#allocation2 + $0x70] sm:$0xff]
    %v95 = vld [vmem:[#allocation2 + $0x78] sm:$0xff]
    %v96 = vld [vmem:[#allocation2 + $0x80] sm:$0xff]
    %v97 = vld [vmem:[#allocation2 + $0x88] sm:$0xff]
    %v98 = vld [vmem:[#allocation2 + $0x90] sm:$0xff]
    %v99 = vld [vmem:[#allocation2 + $0x98] sm:$0xff]
    %v100 = vld [vmem:[#allocation2 + $0xa0] sm:$0xff]
    %v101 = vld [vmem:[#allocation2 + $0xa8] sm:$0xff]
    %v102 = vld [vmem:[#allocation2 + $0xb0] sm:$0xff]
    %v103 = vld [vmem:[#allocation2 + $0xb8] sm:$0xff]
    %v104 = vld [vmem:[#allocation2 + $0xc0] sm:$0xff]
    %v105 = vld [vmem:[#allocation2 + $0xc8] sm:$0xff]
    %v106 = vld [vmem:[#allocation2 + $0xd0] sm:$0xff]
    %v107 = vld [vmem:[#allocation2 + $0xd8] sm:$0xff]
    %v108 = vld [vmem:[#allocation2 + $0xe0] sm:$0xff]
    %v109 = vld [vmem:[#allocation2 + $0xe8] sm:$0xff]
    %v110 = vld [vmem:[#allocation2 + $0xf0] sm:$0xff]
    %v111 = vld [vmem:[#allocation2 + $0xf8] sm:$0xff]
    %v112 = vld [vmem:[#allocation2 + $0x100] sm:$0xff]
    %v113 = vld [vmem:[#allocation2 + $0x108] sm:$0xff]
    %v114 = vld [vmem:[#allocation2 + $0x110] sm:$0xff]
    %v115 = vld [vmem:[#allocation2 + $0x118] sm:$0xff]
    %v116 = vld [vmem:[#allocation2 + $0x120] sm:$0xff]
    %v117 = vld [vmem:[#allocation2 + $0x128] sm:$0xff]
    %v118 = vld [vmem:[#allocation2 + $0x130] sm:$0xff]
    %v119 = vld [vmem:[#allocation2 + $0x138] sm:$0xff]
    %v120 = vld [vmem:[#allocation2 + $0x140] sm:$0xff]
    %v121 = vld [vmem:[#allocation2 + $0x148] sm:$0xff]
    %v122 = vld [vmem:[#allocation2 + $0x150] sm:$0xff]
    %v123 = vld [vmem:[#allocation2 + $0x158] sm:$0xff]
    %v124 = vld [vmem:[#allocation2 + $0x160] sm:$0xff]
    %v125 = vld [vmem:[#allocation2 + $0x168] sm:$0xff]
    %v126 = vld [vmem:[#allocation2 + $0x170] sm:$0xff]
    %v127 = vld [vmem:[#allocation2 + $0x178] sm:$0xff]
    %v128 = vld [vmem:[#allocation2 + $0x180] sm:$0xff]
    %v129 = vld [vmem:[#allocation2 + $0x188] sm:$0xff]
    %v130 = vld [vmem:[#allocation2 + $0x190] sm:$0xff]
    %v131 = vld [vmem:[#allocation2 + $0x198] sm:$0xff]
    %v132 = vld [vmem:[#allocation2 + $0x1a0] sm:$0xff]
    %v133 = vld [vmem:[#allocation2 + $0x1a8] sm:$0xff]
    %v134 = vld [vmem:[#allocation2 + $0x1b0] sm:$0xff]
    %v135 = vld [vmem:[#allocation2 + $0x1b8] sm:$0xff]
    %v136 = vld [vmem:[#allocation2 + $0x1c0] sm:$0xff]
    %v137 = vld [vmem:[#allocation2 + $0x1c8] sm:$0xff]
    %v138 = vld [vmem:[#allocation2 + $0x1d0] sm:$0xff]
    %v139 = vld [vmem:[#allocation2 + $0x1d8] sm:$0xff]
    %v140 = vld [vmem:[#allocation2 + $0x1e0] sm:$0xff]
    %v141 = vld [vmem:[#allocation2 + $0x1e8] sm:$0xff]
    %v142 = vld [vmem:[#allocation2 + $0x1f0] sm:$0xff]
    %v143 = vld [vmem:[#allocation2 + $0x1f8] sm:$0xff]
    %v144 = vld [vmem:[%s6] sm:$0xff]
    %v145 = vld [vmem:[%s6 + $0x8] sm:$0xff]
    %v146 = vld [vmem:[%s6 + $0x10] sm:$0xff]
    %v147 = vld [vmem:[%s6 + $0x18] sm:$0xff]
    %v148 = vlaneseq
    %v149 = vshrl.u32 %v148, 7
    %v150 = vsub.s32 0, %v149
    %v151 = vrot.slane %v144, %v150
    %v152 = vlaneseq
    %v153 = vshrl.u32 %v152, 7
    %v154 = vsub.s32 0, %v153
    %v155 = vrot.slane %v145, %v154
    %v156 = vlaneseq
    %v157 = vshrl.u32 %v156, 7
    %v158 = vsub.s32 0, %v157
    %v159 = vrot.slane %v146, %v158
    %160 = vmatprep.subr.mxu0 %v141
    %161 = vmatpush1.msra.mxu0 %v140
    %162 = vmatprep.subr.mxu0 %v137
    %163 = vmatpush1.msra.mxu0 %v136
    %164 = vmatprep.subr.mxu0 %v133
    %165 = vmatpush1.msra.mxu0 %v132
    %166 = vmatprep.subr.mxu0 %v129
    %167 = vmatpush1.msra.mxu0 %v128
    %168 = vmatprep.subr.mxu0 %v125
    %169 = vmatpush1.msra.mxu0 %v124
    %170 = vmatprep.subr.mxu0 %v121
    %171 = vmatpush1.msra.mxu0 %v120
    %172 = vmatprep.subr.mxu0 %v117
    %173 = vmatpush1.msra.mxu0 %v116
    %174 = vmatprep.subr.mxu0 %v113
    %175 = vmatpush1.msra.mxu0 %v112
    %176 = vmatprep.subr.mxu0 %v109
    %177 = vmatpush1.msra.mxu0 %v108
    %178 = vmatprep.subr.mxu0 %v105
    %179 = vmatpush1.msra.mxu0 %v104
    %180 = vmatprep.subr.mxu0 %v101
    %181 = vmatpush1.msra.mxu0 %v100
    %182 = vmatprep.subr.mxu0 %v97
    %183 = vmatpush1.msra.mxu0 %v96
    %184 = vmatprep.subr.mxu0 %v93
    %185 = vmatpush1.msra.mxu0 %v92
    %186 = vmatprep.subr.mxu0 %v89
    %187 = vmatpush1.msra.mxu0 %v88
    %188 = vmatprep.subr.mxu0 %v85
    %189 = vmatpush1.msra.mxu0 %v84
    %190 = vmatprep.subr.mxu0 %v81
    %191 = vmatpush1.msra.mxu0 %v80
    %192 = vmatprep.subr.mxu0 0.0
    %193 = vmatpush2.msra.mxu0 0.0
    %194 = vmatprep.subr.mxu0 0.0
    %195 = vmatpush2.msra.mxu0 0.0
    %196 = vmatprep.subr.mxu0 0.0
    %197 = vmatpush2.msra.mxu0 0.0
    %198 = vmatprep.subr.mxu0 0.0
    %199 = vmatpush2.msra.mxu0 0.0
    %200 = vmatprep.subr.mxu0 0.0
    %201 = vmatpush2.msra.mxu0 0.0
    %202 = vmatprep.subr.mxu0 0.0
    %203 = vmatpush2.msra.mxu0 0.0
    %204 = vmatprep.subr.mxu0 0.0
    %205 = vmatpush2.msra.mxu0 0.0
    %206 = vmatprep.subr.mxu0 0.0
    %207 = vmatpush2.msra.mxu0 0.0
    %208 = vmatprep.subr.mxu0 0.0
    %209 = vmatpush2.msra.mxu0 0.0
    %210 = vmatprep.subr.mxu0 0.0
    %211 = vmatpush2.msra.mxu0 0.0
    %212 = vmatprep.subr.mxu0 0.0
    %213 = vmatpush2.msra.mxu0 0.0
    %214 = vmatprep.subr.mxu0 0.0
    %215 = vmatpush2.msra.mxu0 0.0
    %216 = vmatprep.subr.mxu0 0.0
    %217 = vmatpush2.msra.mxu0 0.0
    %218 = vmatprep.subr.mxu0 0.0
    %219 = vmatpush2.msra.mxu0 0.0
    %220 = vmatprep.subr.mxu0 0.0
    %221 = vmatpush2.msra.mxu0 0.0
    %222 = vmatprep.subr.mxu0 0.0
    %223 = vmatpush2.msra.mxu0 0.0
    %224 = vmatprep.mubr.f32.mxu0 0.0
    %225 = vmatmul.mubr.f32.gmra.mxu0 %v68
    %v226 = vpop.f32.mrf.mxu0
    %v227 = vadd.f32 %v151, %v226
    %v228 = vpop.f32.mrf.mxu0
    %v229 = vadd.f32 %v155, %v228
    %230 = vmatprep.mubr.f32.mxu0 0.0
    %231 = vmatmul.mubr.f32.gmra.mxu0 %v69
    %v232 = vpop.f32.mrf.mxu0
    %v233 = vadd.f32 %v151, %v232
    %v234 = vpop.f32.mrf.mxu0
    %v235 = vadd.f32 %v155, %v234
    %236 = vmatprep.mubr.f32.mxu0 0.0
    %237 = vmatmul.mubr.f32.gmra.mxu0 %v70
    %v238 = vpop.f32.mrf.mxu0
    %v239 = vadd.f32 %v151, %v238
    %v240 = vpop.f32.mrf.mxu0
    %v241 = vadd.f32 %v155, %v240
    %242 = vmatprep.mubr.f32.mxu0 0.0
    %243 = vmatmul.mubr.f32.gmra.mxu0 %v71
    %v244 = vpop.f32.mrf.mxu0
    %v245 = vadd.f32 %v151, %v244
    %v246 = vpop.f32.mrf.mxu0
    %v247 = vadd.f32 %v155, %v246
    %248 = vdwg.mxu0
    %249 = vmatprep.subr.mxu0 0.0
    %250 = vmatpush1.msra.mxu0 %v142
    %251 = vmatprep.subr.mxu0 0.0
    %252 = vmatpush1.msra.mxu0 %v138
    %253 = vmatprep.subr.mxu0 0.0
    %254 = vmatpush1.msra.mxu0 %v134
    %255 = vmatprep.subr.mxu0 0.0
    %256 = vmatpush1.msra.mxu0 %v130
    %257 = vmatprep.subr.mxu0 0.0
    %258 = vmatpush1.msra.mxu0 %v126
    %259 = vmatprep.subr.mxu0 0.0
    %260 = vmatpush1.msra.mxu0 %v122
    %261 = vmatprep.subr.mxu0 0.0
    %262 = vmatpush1.msra.mxu0 %v118
    %263 = vmatprep.subr.mxu0 0.0
    %264 = vmatpush1.msra.mxu0 %v114
    %265 = vmatprep.subr.mxu0 0.0
    %266 = vmatpush1.msra.mxu0 %v110
    %267 = vmatprep.subr.mxu0 0.0
    %268 = vmatpush1.msra.mxu0 %v106
    %269 = vmatprep.subr.mxu0 0.0
    %270 = vmatpush1.msra.mxu0 %v102
    %271 = vmatprep.subr.mxu0 0.0
    %272 = vmatpush1.msra.mxu0 %v98
    %273 = vmatprep.subr.mxu0 0.0
    %274 = vmatpush1.msra.mxu0 %v94
    %275 = vmatprep.subr.mxu0 0.0
    %276 = vmatpush1.msra.mxu0 %v90
    %277 = vmatprep.subr.mxu0 0.0
    %278 = vmatpush1.msra.mxu0 %v86
    %279 = vmatprep.subr.mxu0 0.0
    %280 = vmatpush1.msra.mxu0 %v82
    %281 = vmatprep.subr.mxu0 0.0
    %282 = vmatpush2.msra.mxu0 0.0
    %283 = vmatprep.subr.mxu0 0.0
    %284 = vmatpush2.msra.mxu0 0.0
    %285 = vmatprep.subr.mxu0 0.0
    %286 = vmatpush2.msra.mxu0 0.0
    %287 = vmatprep.subr.mxu0 0.0
    %288 = vmatpush2.msra.mxu0 0.0
    %289 = vmatprep.subr.mxu0 0.0
    %290 = vmatpush2.msra.mxu0 0.0
    %291 = vmatprep.subr.mxu0 0.0
    %292 = vmatpush2.msra.mxu0 0.0
    %293 = vmatprep.subr.mxu0 0.0
    %294 = vmatpush2.msra.mxu0 0.0
    %295 = vmatprep.subr.mxu0 0.0
    %296 = vmatpush2.msra.mxu0 0.0
    %297 = vmatprep.subr.mxu0 0.0
    %298 = vmatpush2.msra.mxu0 0.0
    %299 = vmatprep.subr.mxu0 0.0
    %300 = vmatpush2.msra.mxu0 0.0
    %301 = vmatprep.subr.mxu0 0.0
    %302 = vmatpush2.msra.mxu0 0.0
    %303 = vmatprep.subr.mxu0 0.0
    %304 = vmatpush2.msra.mxu0 0.0
    %305 = vmatprep.subr.mxu0 0.0
    %306 = vmatpush2.msra.mxu0 0.0
    %307 = vmatprep.subr.mxu0 0.0
    %308 = vmatpush2.msra.mxu0 0.0
    %309 = vmatprep.subr.mxu0 0.0
    %310 = vmatpush2.msra.mxu0 0.0
    %311 = vmatprep.subr.mxu0 0.0
    %312 = vmatpush2.msra.mxu0 0.0
    %313 = vmatprep.mubr.f32.mxu0 0.0
    %314 = vmatmul.mubr.f32.gmra.mxu0 %v68
    %v315 = vpop.f32.mrf.mxu0
    %v316 = vadd.f32 %v159, %v315
    %v317 = vpop.f32.mrf.mxu0
    %318 = vmatprep.mubr.f32.mxu0 0.0
    %319 = vmatmul.mubr.f32.gmra.mxu0 %v69
    %v320 = vpop.f32.mrf.mxu0
    %v321 = vadd.f32 %v159, %v320
    %v322 = vpop.f32.mrf.mxu0
    %323 = vmatprep.mubr.f32.mxu0 0.0
    %324 = vmatmul.mubr.f32.gmra.mxu0 %v70
    %v325 = vpop.f32.mrf.mxu0
    %v326 = vadd.f32 %v159, %v325
    %v327 = vpop.f32.mrf.mxu0
    %328 = vmatprep.mubr.f32.mxu0 0.0
    %329 = vmatmul.mubr.f32.gmra.mxu0 %v71
    %v330 = vpop.f32.mrf.mxu0
    %v331 = vadd.f32 %v159, %v330
    %v332 = vpop.f32.mrf.mxu0
    %333 = vdwg.mxu0
    %vm334 = vcmask 261120
    %v336 = vsel %vm334, %v227, 0
    %v339 = vsel %vm334, %v233, 0
    %v342 = vsel %vm334, %v239, 0
    %v345 = vsel %vm334, %v245, 0
    %v348 = vsel %vm334, %v229, 0
    %v351 = vsel %vm334, %v235, 0
    %v354 = vsel %vm334, %v241, 0
    %v357 = vsel %vm334, %v247, 0
    %359 = vmatprep.subr.mxu0 0.0
    %360 = vmatpush1.xpose.msra.mxu0 0.0
    %361 = vmatprep.subr.mxu0 0.0
    %362 = vmatpush1.xpose.msra.mxu0 0.0
    %363 = vmatprep.subr.mxu0 0.0
    %364 = vmatpush1.xpose.msra.mxu0 0.0
    %365 = vmatprep.subr.mxu0 0.0
    %366 = vmatpush1.xpose.msra.mxu0 0.0
    %367 = vmatprep.subr.mxu0 0.0
    %368 = vmatpush1.xpose.msra.mxu0 0.0
    %369 = vmatprep.subr.mxu0 0.0
    %370 = vmatpush1.xpose.msra.mxu0 0.0
    %371 = vmatprep.subr.mxu0 0.0
    %372 = vmatpush1.xpose.msra.mxu0 0.0
    %373 = vmatprep.subr.mxu0 0.0
    %374 = vmatpush1.xpose.msra.mxu0 0.0
    %375 = vmatprep.subr.mxu0 0.0
    %376 = vmatpush1.xpose.msra.mxu0 0.0
    %377 = vmatprep.subr.mxu0 0.0
    %378 = vmatpush1.xpose.msra.mxu0 0.0
    %379 = vmatprep.subr.mxu0 0.0
    %380 = vmatpush1.xpose.msra.mxu0 0.0
    %381 = vmatprep.subr.mxu0 0.0
    %382 = vmatpush1.xpose.msra.mxu0 0.0
    %383 = vmatprep.subr.mxu0 0.0
    %384 = vmatpush1.xpose.msra.mxu0 %v357
    %385 = vmatprep.subr.mxu0 0.0
    %386 = vmatpush1.xpose.msra.mxu0 %v354
    %387 = vmatprep.subr.mxu0 0.0
    %388 = vmatpush1.xpose.msra.mxu0 %v351
    %389 = vmatprep.subr.mxu0 0.0
    %390 = vmatpush1.xpose.msra.mxu0 %v348
    %391 = vmatprep.subr.mxu0 0.0
    %392 = vmatpush2.xpose.msra.mxu0 0.0
    %393 = vmatprep.subr.mxu0 0.0
    %394 = vmatpush2.xpose.msra.mxu0 0.0
    %395 = vmatprep.subr.mxu0 0.0
    %396 = vmatpush2.xpose.msra.mxu0 0.0
    %397 = vmatprep.subr.mxu0 0.0
    %398 = vmatpush2.xpose.msra.mxu0 0.0
    %399 = vmatprep.subr.mxu0 0.0
    %400 = vmatpush2.xpose.msra.mxu0 0.0
    %401 = vmatprep.subr.mxu0 0.0
    %402 = vmatpush2.xpose.msra.mxu0 0.0
    %403 = vmatprep.subr.mxu0 0.0
    %404 = vmatpush2.xpose.msra.mxu0 0.0
    %405 = vmatprep.subr.mxu0 0.0
    %406 = vmatpush2.xpose.msra.mxu0 0.0
    %407 = vmatprep.subr.mxu0 0.0
    %408 = vmatpush2.xpose.msra.mxu0 0.0
    %409 = vmatprep.subr.mxu0 0.0
    %410 = vmatpush2.xpose.msra.mxu0 0.0
    %411 = vmatprep.subr.mxu0 0.0
    %412 = vmatpush2.xpose.msra.mxu0 0.0
    %413 = vmatprep.subr.mxu0 0.0
    %414 = vmatpush2.xpose.msra.mxu0 0.0
    %415 = vmatprep.subr.mxu0 0.0
    %416 = vmatpush2.xpose.msra.mxu0 0.0
    %417 = vmatprep.subr.mxu0 0.0
    %418 = vmatpush2.xpose.msra.mxu0 0.0
    %419 = vmatprep.subr.mxu0 0.0
    %420 = vmatpush2.xpose.msra.mxu0 0.0
    %421 = vmatprep.subr.mxu0 0.0
    %422 = vmatpush2.xpose.msra.mxu0 0.0
    %423 = vmatprep.mubr.f32.mxu0 0.0
    %424 = vmatmul.mubr.f32.gmra.mxu0 %v336
    %v425 = vpop.f32.mrf.mxu0
    %v426 = vadd.f32 %v72, %v425
    %v427 = vpop.f32.mrf.mxu0
    %428 = vmatprep.mubr.f32.mxu0 0.0
    %429 = vmatmul.mubr.f32.gmra.mxu0 %v339
    %v430 = vpop.f32.mrf.mxu0
    %v431 = vadd.f32 %v73, %v430
    %v432 = vpop.f32.mrf.mxu0
    %433 = vmatprep.mubr.f32.mxu0 0.0
    %434 = vmatmul.mubr.f32.gmra.mxu0 %v342
    %v435 = vpop.f32.mrf.mxu0
    %v436 = vadd.f32 %v74, %v435
    %v437 = vpop.f32.mrf.mxu0
    %438 = vmatprep.mubr.f32.mxu0 0.0
    %439 = vmatmul.mubr.f32.gmra.mxu0 %v345
    %v440 = vpop.f32.mrf.mxu0
    %v441 = vadd.f32 %v75, %v440
    %v442 = vpop.f32.mrf.mxu0
    %443 = vdwg.mxu0
    %v444 = vsel %vm334, %v426, -inf
    %445 = vmax.xlane.f32.xlu0 %v444
    %v446 = vpop.xlane.xlu0 %445
    %v447 = vsel %vm334, %v431, -inf
    %448 = vmax.xlane.f32.xlu0 %v447
    %v449 = vpop.xlane.xlu0 %448
    %v450 = vsel %vm334, %v436, -inf
    %451 = vmax.xlane.f32.xlu0 %v450
    %v452 = vpop.xlane.xlu0 %451
    %v453 = vsel %vm334, %v441, -inf
    %454 = vmax.xlane.f32.xlu0 %v453
    %v455 = vpop.xlane.xlu0 %454
    %v456 = vsub.f32 %v426, %v446
    %v457 = vsub.f32 %v431, %v449
    %v458 = vsub.f32 %v436, %v452
    %v459 = vsub.f32 %v441, %v455
    %v460 = vmul.f32 %v456, 1.442695
    %v461 = vpow.pop %v460
    %v462 = vmul.f32 %v457, 1.442695
    %v463 = vpow.pop %v462
    %v464 = vmul.f32 %v458, 1.442695
    %v465 = vpow.pop %v464
    %v466 = vmul.f32 %v459, 1.442695
    %v467 = vpow.pop %v466
    %v468 = vsel %vm334, %v461, 0.0
    %469 = vadd.xlane.f32.xlu0 %v468
    %v470 = vpop.xlane.xlu0 %469
    %v471 = vsel %vm334, %v463, 0.0
    %472 = vadd.xlane.f32.xlu0 %v471
    %v473 = vpop.xlane.xlu0 %472
    %v474 = vsel %vm334, %v465, 0.0
    %475 = vadd.xlane.f32.xlu0 %v474
    %v476 = vpop.xlane.xlu0 %475
    %v477 = vsel %vm334, %v467, 0.0
    %478 = vadd.xlane.f32.xlu0 %v477
    %v479 = vpop.xlane.xlu0 %478
    %v480 = vrcp.pop %v470
    %v481 = vrcp.pop %v473
    %v482 = vrcp.pop %v476
    %v483 = vrcp.pop %v479
    %v484 = vmul.f32 %v461, %v480
    %v485 = vmul.f32 %v463, %v481
    %v486 = vmul.f32 %v465, %v482
    %v487 = vmul.f32 %v467, %v483
    %v489 = vsel %vm334, %v484, 0
    %v492 = vsel %vm334, %v485, 0
    %v495 = vsel %vm334, %v486, 0
    %v498 = vsel %vm334, %v487, 0
    %500 = vmatprep.subr.mxu0 0.0
    %501 = vmatpush1.msra.mxu0 0.0
    %502 = vmatprep.subr.mxu0 0.0
    %503 = vmatpush1.msra.mxu0 0.0
    %504 = vmatprep.subr.mxu0 0.0
    %505 = vmatpush1.msra.mxu0 0.0
    %506 = vmatprep.subr.mxu0 0.0
    %507 = vmatpush1.msra.mxu0 0.0
    %508 = vmatprep.subr.mxu0 0.0
    %509 = vmatpush1.msra.mxu0 0.0
    %510 = vmatprep.subr.mxu0 0.0
    %511 = vmatpush1.msra.mxu0 0.0
    %512 = vmatprep.subr.mxu0 0.0
    %513 = vmatpush1.msra.mxu0 0.0
    %514 = vmatprep.subr.mxu0 0.0
    %515 = vmatpush1.msra.mxu0 0.0
    %516 = vmatprep.subr.mxu0 0.0
    %517 = vmatpush1.msra.mxu0 0.0
    %518 = vmatprep.subr.mxu0 0.0
    %519 = vmatpush1.msra.mxu0 0.0
    %520 = vmatprep.subr.mxu0 0.0
    %521 = vmatpush1.msra.mxu0 0.0
    %522 = vmatprep.subr.mxu0 0.0
    %523 = vmatpush1.msra.mxu0 0.0
    %524 = vmatprep.subr.mxu0 0.0
    %525 = vmatpush1.msra.mxu0 %v331
    %526 = vmatprep.subr.mxu0 0.0
    %527 = vmatpush1.msra.mxu0 %v326
    %528 = vmatprep.subr.mxu0 0.0
    %529 = vmatpush1.msra.mxu0 %v321
    %530 = vmatprep.subr.mxu0 0.0
    %531 = vmatpush1.msra.mxu0 %v316
    %532 = vmatprep.subr.mxu0 0.0
    %533 = vmatpush2.msra.mxu0 0.0
    %534 = vmatprep.subr.mxu0 0.0
    %535 = vmatpush2.msra.mxu0 0.0
    %536 = vmatprep.subr.mxu0 0.0
    %537 = vmatpush2.msra.mxu0 0.0
    %538 = vmatprep.subr.mxu0 0.0
    %539 = vmatpush2.msra.mxu0 0.0
    %540 = vmatprep.subr.mxu0 0.0
    %541 = vmatpush2.msra.mxu0 0.0
    %542 = vmatprep.subr.mxu0 0.0
    %543 = vmatpush2.msra.mxu0 0.0
    %544 = vmatprep.subr.mxu0 0.0
    %545 = vmatpush2.msra.mxu0 0.0
    %546 = vmatprep.subr.mxu0 0.0
    %547 = vmatpush2.msra.mxu0 0.0
    %548 = vmatprep.subr.mxu0 0.0
    %549 = vmatpush2.msra.mxu0 0.0
    %550 = vmatprep.subr.mxu0 0.0
    %551 = vmatpush2.msra.mxu0 0.0
    %552 = vmatprep.subr.mxu0 0.0
    %553 = vmatpush2.msra.mxu0 0.0
    %554 = vmatprep.subr.mxu0 0.0
    %555 = vmatpush2.msra.mxu0 0.0
    %556 = vmatprep.subr.mxu0 0.0
    %557 = vmatpush2.msra.mxu0 0.0
    %558 = vmatprep.subr.mxu0 0.0
    %559 = vmatpush2.msra.mxu0 0.0
    %560 = vmatprep.subr.mxu0 0.0
    %561 = vmatpush2.msra.mxu0 0.0
    %562 = vmatprep.subr.mxu0 0.0
    %563 = vmatpush2.msra.mxu0 0.0
    %564 = vmatprep.mubr.f32.mxu0 0.0
    %565 = vmatmul.mubr.f32.gmra.mxu0 %v489
    %v566 = vpop.f32.mrf.mxu0
    %v567 = vadd.f32 0.0, %v566
    %v568 = vpop.f32.mrf.mxu0
    %569 = vmatprep.mubr.f32.mxu0 0.0
    %570 = vmatmul.mubr.f32.gmra.mxu0 %v492
    %v571 = vpop.f32.mrf.mxu0
    %v572 = vadd.f32 0.0, %v571
    %v573 = vpop.f32.mrf.mxu0
    %574 = vmatprep.mubr.f32.mxu0 0.0
    %575 = vmatmul.mubr.f32.gmra.mxu0 %v495
    %v576 = vpop.f32.mrf.mxu0
    %v577 = vadd.f32 0.0, %v576
    %v578 = vpop.f32.mrf.mxu0
    %579 = vmatprep.mubr.f32.mxu0 0.0
    %580 = vmatmul.mubr.f32.gmra.mxu0 %v498
    %v581 = vpop.f32.mrf.mxu0
    %v582 = vadd.f32 0.0, %v581
    %v583 = vpop.f32.mrf.mxu0
    %584 = vdwg.mxu0
    %585 = vrot.lane.b32.xlu0 %v227, 96
    %v586 = vpop.permute.xlu0 %585
    %587 = vrot.lane.b32.xlu0 %v233, 96
    %v588 = vpop.permute.xlu0 %587
    %589 = vrot.lane.b32.xlu0 %v239, 96
    %v590 = vpop.permute.xlu0 %589
    %591 = vrot.lane.b32.xlu0 %v245, 96
    %v592 = vpop.permute.xlu0 %591
    %593 = vrot.lane.b32.xlu0 %v229, 96
    %v594 = vpop.permute.xlu0 %593
    %595 = vrot.lane.b32.xlu0 %v235, 96
    %v596 = vpop.permute.xlu0 %595
    %597 = vrot.lane.b32.xlu0 %v241, 96
    %v598 = vpop.permute.xlu0 %597
    %599 = vrot.lane.b32.xlu0 %v247, 96
    %v600 = vpop.permute.xlu0 %599
    %v601 = vsel %vm334, %v586, 0
    %v603 = vsel %vm334, %v588, 0
    %v605 = vsel %vm334, %v590, 0
    %v607 = vsel %vm334, %v592, 0
    %v609 = vsel %vm334, %v594, 0
    %v611 = vsel %vm334, %v596, 0
    %v613 = vsel %vm334, %v598, 0
    %v615 = vsel %vm334, %v600, 0
    %617 = vmatprep.subr.mxu0 0.0
    %618 = vmatpush1.xpose.msra.mxu0 0.0
    %619 = vmatprep.subr.mxu0 0.0
    %620 = vmatpush1.xpose.msra.mxu0 0.0
    %621 = vmatprep.subr.mxu0 0.0
    %622 = vmatpush1.xpose.msra.mxu0 0.0
    %623 = vmatprep.subr.mxu0 0.0
    %624 = vmatpush1.xpose.msra.mxu0 0.0
    %625 = vmatprep.subr.mxu0 0.0
    %626 = vmatpush1.xpose.msra.mxu0 0.0
    %627 = vmatprep.subr.mxu0 0.0
    %628 = vmatpush1.xpose.msra.mxu0 0.0
    %629 = vmatprep.subr.mxu0 0.0
    %630 = vmatpush1.xpose.msra.mxu0 0.0
    %631 = vmatprep.subr.mxu0 0.0
    %632 = vmatpush1.xpose.msra.mxu0 0.0
    %633 = vmatprep.subr.mxu0 0.0
    %634 = vmatpush1.xpose.msra.mxu0 0.0
    %635 = vmatprep.subr.mxu0 0.0
    %636 = vmatpush1.xpose.msra.mxu0 0.0
    %637 = vmatprep.subr.mxu0 0.0
    %638 = vmatpush1.xpose.msra.mxu0 0.0
    %639 = vmatprep.subr.mxu0 0.0
    %640 = vmatpush1.xpose.msra.mxu0 0.0
    %641 = vmatprep.subr.mxu0 0.0
    %642 = vmatpush1.xpose.msra.mxu0 %v615
    %643 = vmatprep.subr.mxu0 0.0
    %644 = vmatpush1.xpose.msra.mxu0 %v613
    %645 = vmatprep.subr.mxu0 0.0
    %646 = vmatpush1.xpose.msra.mxu0 %v611
    %647 = vmatprep.subr.mxu0 0.0
    %648 = vmatpush1.xpose.msra.mxu0 %v609
    %649 = vmatprep.subr.mxu0 0.0
    %650 = vmatpush2.xpose.msra.mxu0 0.0
    %651 = vmatprep.subr.mxu0 0.0
    %652 = vmatpush2.xpose.msra.mxu0 0.0
    %653 = vmatprep.subr.mxu0 0.0
    %654 = vmatpush2.xpose.msra.mxu0 0.0
    %655 = vmatprep.subr.mxu0 0.0
    %656 = vmatpush2.xpose.msra.mxu0 0.0
    %657 = vmatprep.subr.mxu0 0.0
    %658 = vmatpush2.xpose.msra.mxu0 0.0
    %659 = vmatprep.subr.mxu0 0.0
    %660 = vmatpush2.xpose.msra.mxu0 0.0
    %661 = vmatprep.subr.mxu0 0.0
    %662 = vmatpush2.xpose.msra.mxu0 0.0
    %663 = vmatprep.subr.mxu0 0.0
    %664 = vmatpush2.xpose.msra.mxu0 0.0
    %665 = vmatprep.subr.mxu0 0.0
    %666 = vmatpush2.xpose.msra.mxu0 0.0
    %667 = vmatprep.subr.mxu0 0.0
    %668 = vmatpush2.xpose.msra.mxu0 0.0
    %669 = vmatprep.subr.mxu0 0.0
    %670 = vmatpush2.xpose.msra.mxu0 0.0
    %671 = vmatprep.subr.mxu0 0.0
    %672 = vmatpush2.xpose.msra.mxu0 0.0
    %673 = vmatprep.subr.mxu0 0.0
    %674 = vmatpush2.xpose.msra.mxu0 0.0
    %675 = vmatprep.subr.mxu0 0.0
    %676 = vmatpush2.xpose.msra.mxu0 0.0
    %677 = vmatprep.subr.mxu0 0.0
    %678 = vmatpush2.xpose.msra.mxu0 0.0
    %679 = vmatprep.subr.mxu0 0.0
    %680 = vmatpush2.xpose.msra.mxu0 0.0
    %681 = vmatprep.mubr.f32.mxu0 0.0
    %682 = vmatmul.mubr.f32.gmra.mxu0 %v601
    %v683 = vpop.f32.mrf.mxu0
    %v684 = vadd.f32 %v72, %v683
    %v685 = vpop.f32.mrf.mxu0
    %686 = vmatprep.mubr.f32.mxu0 0.0
    %687 = vmatmul.mubr.f32.gmra.mxu0 %v603
    %v688 = vpop.f32.mrf.mxu0
    %v689 = vadd.f32 %v73, %v688
    %v690 = vpop.f32.mrf.mxu0
    %691 = vmatprep.mubr.f32.mxu0 0.0
    %692 = vmatmul.mubr.f32.gmra.mxu0 %v605
    %v693 = vpop.f32.mrf.mxu0
    %v694 = vadd.f32 %v74, %v693
    %v695 = vpop.f32.mrf.mxu0
    %696 = vmatprep.mubr.f32.mxu0 0.0
    %697 = vmatmul.mubr.f32.gmra.mxu0 %v607
    %v698 = vpop.f32.mrf.mxu0
    %v699 = vadd.f32 %v75, %v698
    %v700 = vpop.f32.mrf.mxu0
    %701 = vdwg.mxu0
    %v702 = vsel %vm334, %v684, -inf
    %703 = vmax.xlane.f32.xlu0 %v702
    %v704 = vpop.xlane.xlu0 %703
    %v705 = vsel %vm334, %v689, -inf
    %706 = vmax.xlane.f32.xlu0 %v705
    %v707 = vpop.xlane.xlu0 %706
    %v708 = vsel %vm334, %v694, -inf
    %709 = vmax.xlane.f32.xlu0 %v708
    %v710 = vpop.xlane.xlu0 %709
    %v711 = vsel %vm334, %v699, -inf
    %712 = vmax.xlane.f32.xlu0 %v711
    %v713 = vpop.xlane.xlu0 %712
    %v714 = vsub.f32 %v684, %v704
    %v715 = vsub.f32 %v689, %v707
    %v716 = vsub.f32 %v694, %v710
    %v717 = vsub.f32 %v699, %v713
    %v718 = vmul.f32 %v714, 1.442695
    %v719 = vpow.pop %v718
    %v720 = vmul.f32 %v715, 1.442695
    %v721 = vpow.pop %v720
    %v722 = vmul.f32 %v716, 1.442695
    %v723 = vpow.pop %v722
    %v724 = vmul.f32 %v717, 1.442695
    %v725 = vpow.pop %v724
    %v726 = vsel %vm334, %v719, 0.0
    %727 = vadd.xlane.f32.xlu0 %v726
    %v728 = vpop.xlane.xlu0 %727
    %v729 = vsel %vm334, %v721, 0.0
    %730 = vadd.xlane.f32.xlu0 %v729
    %v731 = vpop.xlane.xlu0 %730
    %v732 = vsel %vm334, %v723, 0.0
    %733 = vadd.xlane.f32.xlu0 %v732
    %v734 = vpop.xlane.xlu0 %733
    %v735 = vsel %vm334, %v725, 0.0
    %736 = vadd.xlane.f32.xlu0 %v735
    %v737 = vpop.xlane.xlu0 %736
    %v738 = vrcp.pop %v728
    %v739 = vrcp.pop %v731
    %v740 = vrcp.pop %v734
    %v741 = vrcp.pop %v737
    %v742 = vmul.f32 %v719, %v738
    %v743 = vmul.f32 %v721, %v739
    %v744 = vmul.f32 %v723, %v740
    %v745 = vmul.f32 %v725, %v741
    %750 = vrot.lane.b32.xlu0 %v316, 96
    %v751 = vpop.permute.xlu0 %750
    %752 = vrot.lane.b32.xlu0 %v321, 96
    %v753 = vpop.permute.xlu0 %752
    %754 = vrot.lane.b32.xlu0 %v326, 96
    %v755 = vpop.permute.xlu0 %754
    %756 = vrot.lane.b32.xlu0 %v331, 96
    %v757 = vpop.permute.xlu0 %756
    %v763 = vsel %vm334, %v742, 0
    %v766 = vsel %vm334, %v743, 0
    %v769 = vsel %vm334, %v744, 0
    %v772 = vsel %vm334, %v745, 0
    %774 = vmatprep.subr.mxu0 0.0
    %775 = vmatpush1.msra.mxu0 0.0
    %776 = vmatprep.subr.mxu0 0.0
    %777 = vmatpush1.msra.mxu0 0.0
    %778 = vmatprep.subr.mxu0 0.0
    %779 = vmatpush1.msra.mxu0 0.0
    %780 = vmatprep.subr.mxu0 0.0
    %781 = vmatpush1.msra.mxu0 0.0
    %782 = vmatprep.subr.mxu0 0.0
    %783 = vmatpush1.msra.mxu0 0.0
    %784 = vmatprep.subr.mxu0 0.0
    %785 = vmatpush1.msra.mxu0 0.0
    %786 = vmatprep.subr.mxu0 0.0
    %787 = vmatpush1.msra.mxu0 0.0
    %788 = vmatprep.subr.mxu0 0.0
    %789 = vmatpush1.msra.mxu0 0.0
    %790 = vmatprep.subr.mxu0 0.0
    %791 = vmatpush1.msra.mxu0 0.0
    %792 = vmatprep.subr.mxu0 0.0
    %793 = vmatpush1.msra.mxu0 0.0
    %794 = vmatprep.subr.mxu0 0.0
    %795 = vmatpush1.msra.mxu0 0.0
    %796 = vmatprep.subr.mxu0 0.0
    %797 = vmatpush1.msra.mxu0 0.0
    %798 = vmatprep.subr.mxu0 0.0
    %799 = vmatpush1.msra.mxu0 %v757
    %800 = vmatprep.subr.mxu0 0.0
    %801 = vmatpush1.msra.mxu0 %v755
    %802 = vmatprep.subr.mxu0 0.0
    %803 = vmatpush1.msra.mxu0 %v753
    %804 = vmatprep.subr.mxu0 0.0
    %805 = vmatpush1.msra.mxu0 %v751
    %806 = vmatprep.subr.mxu0 0.0
    %807 = vmatpush2.msra.mxu0 0.0
    %808 = vmatprep.subr.mxu0 0.0
    %809 = vmatpush2.msra.mxu0 0.0
    %810 = vmatprep.subr.mxu0 0.0
    %811 = vmatpush2.msra.mxu0 0.0
    %812 = vmatprep.subr.mxu0 0.0
    %813 = vmatpush2.msra.mxu0 0.0
    %814 = vmatprep.subr.mxu0 0.0
    %815 = vmatpush2.msra.mxu0 0.0
    %816 = vmatprep.subr.mxu0 0.0
    %817 = vmatpush2.msra.mxu0 0.0
    %818 = vmatprep.subr.mxu0 0.0
    %819 = vmatpush2.msra.mxu0 0.0
    %820 = vmatprep.subr.mxu0 0.0
    %821 = vmatpush2.msra.mxu0 0.0
    %822 = vmatprep.subr.mxu0 0.0
    %823 = vmatpush2.msra.mxu0 0.0
    %824 = vmatprep.subr.mxu0 0.0
    %825 = vmatpush2.msra.mxu0 0.0
    %826 = vmatprep.subr.mxu0 0.0
    %827 = vmatpush2.msra.mxu0 0.0
    %828 = vmatprep.subr.mxu0 0.0
    %829 = vmatpush2.msra.mxu0 0.0
    %830 = vmatprep.subr.mxu0 0.0
    %831 = vmatpush2.msra.mxu0 0.0
    %832 = vmatprep.subr.mxu0 0.0
    %833 = vmatpush2.msra.mxu0 0.0
    %834 = vmatprep.subr.mxu0 0.0
    %835 = vmatpush2.msra.mxu0 0.0
    %836 = vmatprep.subr.mxu0 0.0
    %837 = vmatpush2.msra.mxu0 0.0
    %838 = vmatprep.mubr.f32.mxu0 0.0
    %839 = vmatmul.mubr.f32.gmra.mxu0 %v763
    %v840 = vpop.f32.mrf.mxu0
    %v841 = vadd.f32 0.0, %v840
    %v842 = vpop.f32.mrf.mxu0
    %843 = vmatprep.mubr.f32.mxu0 0.0
    %844 = vmatmul.mubr.f32.gmra.mxu0 %v766
    %v845 = vpop.f32.mrf.mxu0
    %v846 = vadd.f32 0.0, %v845
    %v847 = vpop.f32.mrf.mxu0
    %848 = vmatprep.mubr.f32.mxu0 0.0
    %849 = vmatmul.mubr.f32.gmra.mxu0 %v769
    %v850 = vpop.f32.mrf.mxu0
    %v851 = vadd.f32 0.0, %v850
    %v852 = vpop.f32.mrf.mxu0
    %853 = vmatprep.mubr.f32.mxu0 0.0
    %854 = vmatmul.mubr.f32.gmra.mxu0 %v772
    %v855 = vpop.f32.mrf.mxu0
    %v856 = vadd.f32 0.0, %v855
    %v857 = vpop.f32.mrf.mxu0
    %858 = vdwg.mxu0
    %v860 = vsel %vm334, %v841, 0
    %v863 = vsel %vm334, %v846, 0
    %v866 = vsel %vm334, %v851, 0
    %v869 = vsel %vm334, %v856, 0
    %871 = vmatprep.subr.mxu0 0.0
    %872 = vmatpush1.msra.mxu0 0.0
    %873 = vmatprep.subr.mxu0 0.0
    %874 = vmatpush1.msra.mxu0 0.0
    %875 = vmatprep.subr.mxu0 0.0
    %876 = vmatpush1.msra.mxu0 0.0
    %877 = vmatprep.subr.mxu0 0.0
    %878 = vmatpush1.msra.mxu0 0.0
    %879 = vmatprep.subr.mxu0 0.0
    %880 = vmatpush1.msra.mxu0 0.0
    %881 = vmatprep.subr.mxu0 0.0
    %882 = vmatpush1.msra.mxu0 0.0
    %883 = vmatprep.subr.mxu0 0.0
    %884 = vmatpush1.msra.mxu0 0.0
    %885 = vmatprep.subr.mxu0 0.0
    %886 = vmatpush1.msra.mxu0 0.0
    %887 = vmatprep.subr.mxu0 0.0
    %888 = vmatpush1.msra.mxu0 0.0
    %889 = vmatprep.subr.mxu0 0.0
    %890 = vmatpush1.msra.mxu0 0.0
    %891 = vmatprep.subr.mxu0 0.0
    %892 = vmatpush1.msra.mxu0 0.0
    %893 = vmatprep.subr.mxu0 0.0
    %894 = vmatpush1.msra.mxu0 0.0
    %895 = vmatprep.subr.mxu0 0.0
    %896 = vmatpush1.msra.mxu0 %v111
    %897 = vmatprep.subr.mxu0 0.0
    %898 = vmatpush1.msra.mxu0 %v107
    %899 = vmatprep.subr.mxu0 0.0
    %900 = vmatpush1.msra.mxu0 %v103
    %901 = vmatprep.subr.mxu0 0.0
    %902 = vmatpush1.msra.mxu0 %v99
    %903 = vmatprep.subr.mxu0 0.0
    %904 = vmatpush2.msra.mxu0 0.0
    %905 = vmatprep.subr.mxu0 0.0
    %906 = vmatpush2.msra.mxu0 0.0
    %907 = vmatprep.subr.mxu0 0.0
    %908 = vmatpush2.msra.mxu0 0.0
    %909 = vmatprep.subr.mxu0 0.0
    %910 = vmatpush2.msra.mxu0 0.0
    %911 = vmatprep.subr.mxu0 0.0
    %912 = vmatpush2.msra.mxu0 0.0
    %913 = vmatprep.subr.mxu0 0.0
    %914 = vmatpush2.msra.mxu0 0.0
    %915 = vmatprep.subr.mxu0 0.0
    %916 = vmatpush2.msra.mxu0 0.0
    %917 = vmatprep.subr.mxu0 0.0
    %918 = vmatpush2.msra.mxu0 0.0
    %919 = vmatprep.subr.mxu0 0.0
    %920 = vmatpush2.msra.mxu0 0.0
    %921 = vmatprep.subr.mxu0 0.0
    %922 = vmatpush2.msra.mxu0 0.0
    %923 = vmatprep.subr.mxu0 0.0
    %924 = vmatpush2.msra.mxu0 0.0
    %925 = vmatprep.subr.mxu0 0.0
    %926 = vmatpush2.msra.mxu0 0.0
    %927 = vmatprep.subr.mxu0 0.0
    %928 = vmatpush2.msra.mxu0 0.0
    %929 = vmatprep.subr.mxu0 0.0
    %930 = vmatpush2.msra.mxu0 0.0
    %931 = vmatprep.subr.mxu0 0.0
    %932 = vmatpush2.msra.mxu0 0.0
    %933 = vmatprep.subr.mxu0 0.0
    %934 = vmatpush2.msra.mxu0 0.0
    %935 = vmatprep.mubr.f32.mxu0 0.0
    %936 = vmatmul.mubr.f32.gmra.mxu0 %v860
    %v937 = vpop.f32.mrf.mxu0
    %v938 = vadd.f32 0.0, %v937
    %v939 = vpop.f32.mrf.mxu0
    %940 = vmatprep.mubr.f32.mxu0 0.0
    %941 = vmatmul.mubr.f32.gmra.mxu0 %v863
    %v942 = vpop.f32.mrf.mxu0
    %v943 = vadd.f32 0.0, %v942
    %v944 = vpop.f32.mrf.mxu0
    %945 = vmatprep.mubr.f32.mxu0 0.0
    %946 = vmatmul.mubr.f32.gmra.mxu0 %v866
    %v947 = vpop.f32.mrf.mxu0
    %v948 = vadd.f32 0.0, %v947
    %v949 = vpop.f32.mrf.mxu0
    %950 = vmatprep.mubr.f32.mxu0 0.0
    %951 = vmatmul.mubr.f32.gmra.mxu0 %v869
    %v952 = vpop.f32.mrf.mxu0
    %v953 = vadd.f32 0.0, %v952
    %v954 = vpop.f32.mrf.mxu0
    %955 = vdwg.mxu0
    %v957 = vsel %vm334, %v567, 0
    %v960 = vsel %vm334, %v572, 0
    %v963 = vsel %vm334, %v577, 0
    %v966 = vsel %vm334, %v582, 0
    %968 = vmatprep.subr.mxu0 0.0
    %969 = vmatpush1.msra.mxu0 0.0
    %970 = vmatprep.subr.mxu0 0.0
    %971 = vmatpush1.msra.mxu0 0.0
    %972 = vmatprep.subr.mxu0 0.0
    %973 = vmatpush1.msra.mxu0 0.0
    %974 = vmatprep.subr.mxu0 0.0
    %975 = vmatpush1.msra.mxu0 0.0
    %976 = vmatprep.subr.mxu0 0.0
    %977 = vmatpush1.msra.mxu0 0.0
    %978 = vmatprep.subr.mxu0 0.0
    %979 = vmatpush1.msra.mxu0 0.0
    %980 = vmatprep.subr.mxu0 0.0
    %981 = vmatpush1.msra.mxu0 0.0
    %982 = vmatprep.subr.mxu0 0.0
    %983 = vmatpush1.msra.mxu0 0.0
    %984 = vmatprep.subr.mxu0 0.0
    %985 = vmatpush1.msra.mxu0 0.0
    %986 = vmatprep.subr.mxu0 0.0
    %987 = vmatpush1.msra.mxu0 0.0
    %988 = vmatprep.subr.mxu0 0.0
    %989 = vmatpush1.msra.mxu0 0.0
    %990 = vmatprep.subr.mxu0 0.0
    %991 = vmatpush1.msra.mxu0 0.0
    %992 = vmatprep.subr.mxu0 0.0
    %993 = vmatpush1.msra.mxu0 %v95
    %994 = vmatprep.subr.mxu0 0.0
    %995 = vmatpush1.msra.mxu0 %v91
    %996 = vmatprep.subr.mxu0 0.0
    %997 = vmatpush1.msra.mxu0 %v87
    %998 = vmatprep.subr.mxu0 0.0
    %999 = vmatpush1.msra.mxu0 %v83
    %1000 = vmatprep.subr.mxu0 0.0
    %1001 = vmatpush2.msra.mxu0 0.0
    %1002 = vmatprep.subr.mxu0 0.0
    %1003 = vmatpush2.msra.mxu0 0.0
    %1004 = vmatprep.subr.mxu0 0.0
    %1005 = vmatpush2.msra.mxu0 0.0
    %1006 = vmatprep.subr.mxu0 0.0
    %1007 = vmatpush2.msra.mxu0 0.0
    %1008 = vmatprep.subr.mxu0 0.0
    %1009 = vmatpush2.msra.mxu0 0.0
    %1010 = vmatprep.subr.mxu0 0.0
    %1011 = vmatpush2.msra.mxu0 0.0
    %1012 = vmatprep.subr.mxu0 0.0
    %1013 = vmatpush2.msra.mxu0 0.0
    %1014 = vmatprep.subr.mxu0 0.0
    %1015 = vmatpush2.msra.mxu0 0.0
    %1016 = vmatprep.subr.mxu0 0.0
    %1017 = vmatpush2.msra.mxu0 0.0
    %1018 = vmatprep.subr.mxu0 0.0
    %1019 = vmatpush2.msra.mxu0 0.0
    %1020 = vmatprep.subr.mxu0 0.0
    %1021 = vmatpush2.msra.mxu0 0.0
    %1022 = vmatprep.subr.mxu0 0.0
    %1023 = vmatpush2.msra.mxu0 0.0
    %1024 = vmatprep.subr.mxu0 0.0
    %1025 = vmatpush2.msra.mxu0 0.0
    %1026 = vmatprep.subr.mxu0 0.0
    %1027 = vmatpush2.msra.mxu0 0.0
    %1028 = vmatprep.subr.mxu0 0.0
    %1029 = vmatpush2.msra.mxu0 0.0
    %1030 = vmatprep.subr.mxu0 0.0
    %1031 = vmatpush2.msra.mxu0 0.0
    %1032 = vmatprep.mubr.f32.mxu0 0.0
    %1033 = vmatmul.mubr.f32.gmra.mxu0 %v957
    %v1034 = vpop.f32.mrf.mxu0
    %v1035 = vadd.f32 %v938, %v1034
    %v1036 = vpop.f32.mrf.mxu0
    %1037 = vmatprep.mubr.f32.mxu0 0.0
    %1038 = vmatmul.mubr.f32.gmra.mxu0 %v960
    %v1039 = vpop.f32.mrf.mxu0
    %v1040 = vadd.f32 %v943, %v1039
    %v1041 = vpop.f32.mrf.mxu0
    %1042 = vmatprep.mubr.f32.mxu0 0.0
    %1043 = vmatmul.mubr.f32.gmra.mxu0 %v963
    %v1044 = vpop.f32.mrf.mxu0
    %v1045 = vadd.f32 %v948, %v1044
    %v1046 = vpop.f32.mrf.mxu0
    %1047 = vmatprep.mubr.f32.mxu0 0.0
    %1048 = vmatmul.mubr.f32.gmra.mxu0 %v966
    %v1049 = vpop.f32.mrf.mxu0
    %v1050 = vadd.f32 %v953, %v1049
    %v1051 = vpop.f32.mrf.mxu0
    %1052 = vdwg.mxu0
    %1053 = vrot.lane.b32.xlu0 %v227, 64
    %v1054 = vpop.permute.xlu0 %1053
    %1055 = vrot.lane.b32.xlu0 %v233, 64
    %v1056 = vpop.permute.xlu0 %1055
    %1057 = vrot.lane.b32.xlu0 %v239, 64
    %v1058 = vpop.permute.xlu0 %1057
    %1059 = vrot.lane.b32.xlu0 %v245, 64
    %v1060 = vpop.permute.xlu0 %1059
    %1061 = vrot.lane.b32.xlu0 %v229, 64
    %v1062 = vpop.permute.xlu0 %1061
    %1063 = vrot.lane.b32.xlu0 %v235, 64
    %v1064 = vpop.permute.xlu0 %1063
    %1065 = vrot.lane.b32.xlu0 %v241, 64
    %v1066 = vpop.permute.xlu0 %1065
    %1067 = vrot.lane.b32.xlu0 %v247, 64
    %v1068 = vpop.permute.xlu0 %1067
    %v1069 = vsel %vm334, %v1054, 0
    %v1071 = vsel %vm334, %v1056, 0
    %v1073 = vsel %vm334, %v1058, 0
    %v1075 = vsel %vm334, %v1060, 0
    %v1077 = vsel %vm334, %v1062, 0
    %v1079 = vsel %vm334, %v1064, 0
    %v1081 = vsel %vm334, %v1066, 0
    %v1083 = vsel %vm334, %v1068, 0
    %1085 = vmatprep.subr.mxu0 0.0
    %1086 = vmatpush1.xpose.msra.mxu0 0.0
    %1087 = vmatprep.subr.mxu0 0.0
    %1088 = vmatpush1.xpose.msra.mxu0 0.0
    %1089 = vmatprep.subr.mxu0 0.0
    %1090 = vmatpush1.xpose.msra.mxu0 0.0
    %1091 = vmatprep.subr.mxu0 0.0
    %1092 = vmatpush1.xpose.msra.mxu0 0.0
    %1093 = vmatprep.subr.mxu0 0.0
    %1094 = vmatpush1.xpose.msra.mxu0 0.0
    %1095 = vmatprep.subr.mxu0 0.0
    %1096 = vmatpush1.xpose.msra.mxu0 0.0
    %1097 = vmatprep.subr.mxu0 0.0
    %1098 = vmatpush1.xpose.msra.mxu0 0.0
    %1099 = vmatprep.subr.mxu0 0.0
    %1100 = vmatpush1.xpose.msra.mxu0 0.0
    %1101 = vmatprep.subr.mxu0 0.0
    %1102 = vmatpush1.xpose.msra.mxu0 0.0
    %1103 = vmatprep.subr.mxu0 0.0
    %1104 = vmatpush1.xpose.msra.mxu0 0.0
    %1105 = vmatprep.subr.mxu0 0.0
    %1106 = vmatpush1.xpose.msra.mxu0 0.0
    %1107 = vmatprep.subr.mxu0 0.0
    %1108 = vmatpush1.xpose.msra.mxu0 0.0
    %1109 = vmatprep.subr.mxu0 0.0
    %1110 = vmatpush1.xpose.msra.mxu0 %v1083
    %1111 = vmatprep.subr.mxu0 0.0
    %1112 = vmatpush1.xpose.msra.mxu0 %v1081
    %1113 = vmatprep.subr.mxu0 0.0
    %1114 = vmatpush1.xpose.msra.mxu0 %v1079
    %1115 = vmatprep.subr.mxu0 0.0
    %1116 = vmatpush1.xpose.msra.mxu0 %v1077
    %1117 = vmatprep.subr.mxu0 0.0
    %1118 = vmatpush2.xpose.msra.mxu0 0.0
    %1119 = vmatprep.subr.mxu0 0.0
    %1120 = vmatpush2.xpose.msra.mxu0 0.0
    %1121 = vmatprep.subr.mxu0 0.0
    %1122 = vmatpush2.xpose.msra.mxu0 0.0
    %1123 = vmatprep.subr.mxu0 0.0
    %1124 = vmatpush2.xpose.msra.mxu0 0.0
    %1125 = vmatprep.subr.mxu0 0.0
    %1126 = vmatpush2.xpose.msra.mxu0 0.0
    %1127 = vmatprep.subr.mxu0 0.0
    %1128 = vmatpush2.xpose.msra.mxu0 0.0
    %1129 = vmatprep.subr.mxu0 0.0
    %1130 = vmatpush2.xpose.msra.mxu0 0.0
    %1131 = vmatprep.subr.mxu0 0.0
    %1132 = vmatpush2.xpose.msra.mxu0 0.0
    %1133 = vmatprep.subr.mxu0 0.0
    %1134 = vmatpush2.xpose.msra.mxu0 0.0
    %1135 = vmatprep.subr.mxu0 0.0
    %1136 = vmatpush2.xpose.msra.mxu0 0.0
    %1137 = vmatprep.subr.mxu0 0.0
    %1138 = vmatpush2.xpose.msra.mxu0 0.0
    %1139 = vmatprep.subr.mxu0 0.0
    %1140 = vmatpush2.xpose.msra.mxu0 0.0
    %1141 = vmatprep.subr.mxu0 0.0
    %1142 = vmatpush2.xpose.msra.mxu0 0.0
    %1143 = vmatprep.subr.mxu0 0.0
    %1144 = vmatpush2.xpose.msra.mxu0 0.0
    %1145 = vmatprep.subr.mxu0 0.0
    %1146 = vmatpush2.xpose.msra.mxu0 0.0
    %1147 = vmatprep.subr.mxu0 0.0
    %1148 = vmatpush2.xpose.msra.mxu0 0.0
    %1149 = vmatprep.mubr.f32.mxu0 0.0
    %1150 = vmatmul.mubr.f32.gmra.mxu0 %v1069
    %v1151 = vpop.f32.mrf.mxu0
    %v1152 = vadd.f32 %v72, %v1151
    %v1153 = vpop.f32.mrf.mxu0
    %1154 = vmatprep.mubr.f32.mxu0 0.0
    %1155 = vmatmul.mubr.f32.gmra.mxu0 %v1071
    %v1156 = vpop.f32.mrf.mxu0
    %v1157 = vadd.f32 %v73, %v1156
    %v1158 = vpop.f32.mrf.mxu0
    %1159 = vmatprep.mubr.f32.mxu0 0.0
    %1160 = vmatmul.mubr.f32.gmra.mxu0 %v1073
    %v1161 = vpop.f32.mrf.mxu0
    %v1162 = vadd.f32 %v74, %v1161
    %v1163 = vpop.f32.mrf.mxu0
    %1164 = vmatprep.mubr.f32.mxu0 0.0
    %1165 = vmatmul.mubr.f32.gmra.mxu0 %v1075
    %v1166 = vpop.f32.mrf.mxu0
    %v1167 = vadd.f32 %v75, %v1166
    %v1168 = vpop.f32.mrf.mxu0
    %1169 = vdwg.mxu0
    %v1170 = vsel %vm334, %v1152, -inf
    %1171 = vmax.xlane.f32.xlu0 %v1170
    %v1172 = vpop.xlane.xlu0 %1171
    %v1173 = vsel %vm334, %v1157, -inf
    %1174 = vmax.xlane.f32.xlu0 %v1173
    %v1175 = vpop.xlane.xlu0 %1174
    %v1176 = vsel %vm334, %v1162, -inf
    %1177 = vmax.xlane.f32.xlu0 %v1176
    %v1178 = vpop.xlane.xlu0 %1177
    %v1179 = vsel %vm334, %v1167, -inf
    %1180 = vmax.xlane.f32.xlu0 %v1179
    %v1181 = vpop.xlane.xlu0 %1180
    %v1182 = vsub.f32 %v1152, %v1172
    %v1183 = vsub.f32 %v1157, %v1175
    %v1184 = vsub.f32 %v1162, %v1178
    %v1185 = vsub.f32 %v1167, %v1181
    %v1186 = vmul.f32 %v1182, 1.442695
    %v1187 = vpow.pop %v1186
    %v1188 = vmul.f32 %v1183, 1.442695
    %v1189 = vpow.pop %v1188
    %v1190 = vmul.f32 %v1184, 1.442695
    %v1191 = vpow.pop %v1190
    %v1192 = vmul.f32 %v1185, 1.442695
    %v1193 = vpow.pop %v1192
    %v1194 = vsel %vm334, %v1187, 0.0
    %1195 = vadd.xlane.f32.xlu0 %v1194
    %v1196 = vpop.xlane.xlu0 %1195
    %v1197 = vsel %vm334, %v1189, 0.0
    %1198 = vadd.xlane.f32.xlu0 %v1197
    %v1199 = vpop.xlane.xlu0 %1198
    %v1200 = vsel %vm334, %v1191, 0.0
    %1201 = vadd.xlane.f32.xlu0 %v1200
    %v1202 = vpop.xlane.xlu0 %1201
    %v1203 = vsel %vm334, %v1193, 0.0
    %1204 = vadd.xlane.f32.xlu0 %v1203
    %v1205 = vpop.xlane.xlu0 %1204
    %v1206 = vrcp.pop %v1196
    %v1207 = vrcp.pop %v1199
    %v1208 = vrcp.pop %v1202
    %v1209 = vrcp.pop %v1205
    %v1210 = vmul.f32 %v1187, %v1206
    %v1211 = vmul.f32 %v1189, %v1207
    %v1212 = vmul.f32 %v1191, %v1208
    %v1213 = vmul.f32 %v1193, %v1209
    %1214 = vrot.lane.b32.xlu0 %v316, 64
    %v1215 = vpop.permute.xlu0 %1214
    %1216 = vrot.lane.b32.xlu0 %v321, 64
    %v1217 = vpop.permute.xlu0 %1216
    %1218 = vrot.lane.b32.xlu0 %v326, 64
    %v1219 = vpop.permute.xlu0 %1218
    %1220 = vrot.lane.b32.xlu0 %v331, 64
    %v1221 = vpop.permute.xlu0 %1220
    %v1227 = vsel %vm334, %v1210, 0
    %v1230 = vsel %vm334, %v1211, 0
    %v1233 = vsel %vm334, %v1212, 0
    %v1236 = vsel %vm334, %v1213, 0
    %1238 = vmatprep.subr.mxu0 0.0
    %1239 = vmatpush1.msra.mxu0 0.0
    %1240 = vmatprep.subr.mxu0 0.0
    %1241 = vmatpush1.msra.mxu0 0.0
    %1242 = vmatprep.subr.mxu0 0.0
    %1243 = vmatpush1.msra.mxu0 0.0
    %1244 = vmatprep.subr.mxu0 0.0
    %1245 = vmatpush1.msra.mxu0 0.0
    %1246 = vmatprep.subr.mxu0 0.0
    %1247 = vmatpush1.msra.mxu0 0.0
    %1248 = vmatprep.subr.mxu0 0.0
    %1249 = vmatpush1.msra.mxu0 0.0
    %1250 = vmatprep.subr.mxu0 0.0
    %1251 = vmatpush1.msra.mxu0 0.0
    %1252 = vmatprep.subr.mxu0 0.0
    %1253 = vmatpush1.msra.mxu0 0.0
    %1254 = vmatprep.subr.mxu0 0.0
    %1255 = vmatpush1.msra.mxu0 0.0
    %1256 = vmatprep.subr.mxu0 0.0
    %1257 = vmatpush1.msra.mxu0 0.0
    %1258 = vmatprep.subr.mxu0 0.0
    %1259 = vmatpush1.msra.mxu0 0.0
    %1260 = vmatprep.subr.mxu0 0.0
    %1261 = vmatpush1.msra.mxu0 0.0
    %1262 = vmatprep.subr.mxu0 0.0
    %1263 = vmatpush1.msra.mxu0 %v1221
    %1264 = vmatprep.subr.mxu0 0.0
    %1265 = vmatpush1.msra.mxu0 %v1219
    %1266 = vmatprep.subr.mxu0 0.0
    %1267 = vmatpush1.msra.mxu0 %v1217
    %1268 = vmatprep.subr.mxu0 0.0
    %1269 = vmatpush1.msra.mxu0 %v1215
    %1270 = vmatprep.subr.mxu0 0.0
    %1271 = vmatpush2.msra.mxu0 0.0
    %1272 = vmatprep.subr.mxu0 0.0
    %1273 = vmatpush2.msra.mxu0 0.0
    %1274 = vmatprep.subr.mxu0 0.0
    %1275 = vmatpush2.msra.mxu0 0.0
    %1276 = vmatprep.subr.mxu0 0.0
    %1277 = vmatpush2.msra.mxu0 0.0
    %1278 = vmatprep.subr.mxu0 0.0
    %1279 = vmatpush2.msra.mxu0 0.0
    %1280 = vmatprep.subr.mxu0 0.0
    %1281 = vmatpush2.msra.mxu0 0.0
    %1282 = vmatprep.subr.mxu0 0.0
    %1283 = vmatpush2.msra.mxu0 0.0
    %1284 = vmatprep.subr.mxu0 0.0
    %1285 = vmatpush2.msra.mxu0 0.0
    %1286 = vmatprep.subr.mxu0 0.0
    %1287 = vmatpush2.msra.mxu0 0.0
    %1288 = vmatprep.subr.mxu0 0.0
    %1289 = vmatpush2.msra.mxu0 0.0
    %1290 = vmatprep.subr.mxu0 0.0
    %1291 = vmatpush2.msra.mxu0 0.0
    %1292 = vmatprep.subr.mxu0 0.0
    %1293 = vmatpush2.msra.mxu0 0.0
    %1294 = vmatprep.subr.mxu0 0.0
    %1295 = vmatpush2.msra.mxu0 0.0
    %1296 = vmatprep.subr.mxu0 0.0
    %1297 = vmatpush2.msra.mxu0 0.0
    %1298 = vmatprep.subr.mxu0 0.0
    %1299 = vmatpush2.msra.mxu0 0.0
    %1300 = vmatprep.subr.mxu0 0.0
    %1301 = vmatpush2.msra.mxu0 0.0
    %1302 = vmatprep.mubr.f32.mxu0 0.0
    %1303 = vmatmul.mubr.f32.gmra.mxu0 %v1227
    %v1304 = vpop.f32.mrf.mxu0
    %v1305 = vadd.f32 0.0, %v1304
    %v1306 = vpop.f32.mrf.mxu0
    %1307 = vmatprep.mubr.f32.mxu0 0.0
    %1308 = vmatmul.mubr.f32.gmra.mxu0 %v1230
    %v1309 = vpop.f32.mrf.mxu0
    %v1310 = vadd.f32 0.0, %v1309
    %v1311 = vpop.f32.mrf.mxu0
    %1312 = vmatprep.mubr.f32.mxu0 0.0
    %1313 = vmatmul.mubr.f32.gmra.mxu0 %v1233
    %v1314 = vpop.f32.mrf.mxu0
    %v1315 = vadd.f32 0.0, %v1314
    %v1316 = vpop.f32.mrf.mxu0
    %1317 = vmatprep.mubr.f32.mxu0 0.0
    %1318 = vmatmul.mubr.f32.gmra.mxu0 %v1236
    %v1319 = vpop.f32.mrf.mxu0
    %v1320 = vadd.f32 0.0, %v1319
    %v1321 = vpop.f32.mrf.mxu0
    %1322 = vdwg.mxu0
    %v1324 = vsel %vm334, %v1305, 0
    %v1327 = vsel %vm334, %v1310, 0
    %v1330 = vsel %vm334, %v1315, 0
    %v1333 = vsel %vm334, %v1320, 0
    %1335 = vmatprep.subr.mxu0 0.0
    %1336 = vmatpush1.msra.mxu0 0.0
    %1337 = vmatprep.subr.mxu0 0.0
    %1338 = vmatpush1.msra.mxu0 0.0
    %1339 = vmatprep.subr.mxu0 0.0
    %1340 = vmatpush1.msra.mxu0 0.0
    %1341 = vmatprep.subr.mxu0 0.0
    %1342 = vmatpush1.msra.mxu0 0.0
    %1343 = vmatprep.subr.mxu0 0.0
    %1344 = vmatpush1.msra.mxu0 0.0
    %1345 = vmatprep.subr.mxu0 0.0
    %1346 = vmatpush1.msra.mxu0 0.0
    %1347 = vmatprep.subr.mxu0 0.0
    %1348 = vmatpush1.msra.mxu0 0.0
    %1349 = vmatprep.subr.mxu0 0.0
    %1350 = vmatpush1.msra.mxu0 0.0
    %1351 = vmatprep.subr.mxu0 0.0
    %1352 = vmatpush1.msra.mxu0 0.0
    %1353 = vmatprep.subr.mxu0 0.0
    %1354 = vmatpush1.msra.mxu0 0.0
    %1355 = vmatprep.subr.mxu0 0.0
    %1356 = vmatpush1.msra.mxu0 0.0
    %1357 = vmatprep.subr.mxu0 0.0
    %1358 = vmatpush1.msra.mxu0 0.0
    %1359 = vmatprep.subr.mxu0 0.0
    %1360 = vmatpush1.msra.mxu0 %v127
    %1361 = vmatprep.subr.mxu0 0.0
    %1362 = vmatpush1.msra.mxu0 %v123
    %1363 = vmatprep.subr.mxu0 0.0
    %1364 = vmatpush1.msra.mxu0 %v119
    %1365 = vmatprep.subr.mxu0 0.0
    %1366 = vmatpush1.msra.mxu0 %v115
    %1367 = vmatprep.subr.mxu0 0.0
    %1368 = vmatpush2.msra.mxu0 0.0
    %1369 = vmatprep.subr.mxu0 0.0
    %1370 = vmatpush2.msra.mxu0 0.0
    %1371 = vmatprep.subr.mxu0 0.0
    %1372 = vmatpush2.msra.mxu0 0.0
    %1373 = vmatprep.subr.mxu0 0.0
    %1374 = vmatpush2.msra.mxu0 0.0
    %1375 = vmatprep.subr.mxu0 0.0
    %1376 = vmatpush2.msra.mxu0 0.0
    %1377 = vmatprep.subr.mxu0 0.0
    %1378 = vmatpush2.msra.mxu0 0.0
    %1379 = vmatprep.subr.mxu0 0.0
    %1380 = vmatpush2.msra.mxu0 0.0
    %1381 = vmatprep.subr.mxu0 0.0
    %1382 = vmatpush2.msra.mxu0 0.0
    %1383 = vmatprep.subr.mxu0 0.0
    %1384 = vmatpush2.msra.mxu0 0.0
    %1385 = vmatprep.subr.mxu0 0.0
    %1386 = vmatpush2.msra.mxu0 0.0
    %1387 = vmatprep.subr.mxu0 0.0
    %1388 = vmatpush2.msra.mxu0 0.0
    %1389 = vmatprep.subr.mxu0 0.0
    %1390 = vmatpush2.msra.mxu0 0.0
    %1391 = vmatprep.subr.mxu0 0.0
    %1392 = vmatpush2.msra.mxu0 0.0
    %1393 = vmatprep.subr.mxu0 0.0
    %1394 = vmatpush2.msra.mxu0 0.0
    %1395 = vmatprep.subr.mxu0 0.0
    %1396 = vmatpush2.msra.mxu0 0.0
    %1397 = vmatprep.subr.mxu0 0.0
    %1398 = vmatpush2.msra.mxu0 0.0
    %1399 = vmatprep.mubr.f32.mxu0 0.0
    %1400 = vmatmul.mubr.f32.gmra.mxu0 %v1324
    %v1401 = vpop.f32.mrf.mxu0
    %v1402 = vadd.f32 0.0, %v1401
    %v1403 = vpop.f32.mrf.mxu0
    %1404 = vmatprep.mubr.f32.mxu0 0.0
    %1405 = vmatmul.mubr.f32.gmra.mxu0 %v1327
    %v1406 = vpop.f32.mrf.mxu0
    %v1407 = vadd.f32 0.0, %v1406
    %v1408 = vpop.f32.mrf.mxu0
    %1409 = vmatprep.mubr.f32.mxu0 0.0
    %1410 = vmatmul.mubr.f32.gmra.mxu0 %v1330
    %v1411 = vpop.f32.mrf.mxu0
    %v1412 = vadd.f32 0.0, %v1411
    %v1413 = vpop.f32.mrf.mxu0
    %1414 = vmatprep.mubr.f32.mxu0 0.0
    %1415 = vmatmul.mubr.f32.gmra.mxu0 %v1333
    %v1416 = vpop.f32.mrf.mxu0
    %v1417 = vadd.f32 0.0, %v1416
    %v1418 = vpop.f32.mrf.mxu0
    %1419 = vdwg.mxu0
    %v1420 = vadd.f32 %v1035, %v1402
    %v1421 = vadd.f32 %v1040, %v1407
    %v1422 = vadd.f32 %v1045, %v1412
    %v1423 = vadd.f32 %v1050, %v1417
    %1424 = vrot.lane.b32.xlu0 %v227, 32
    %v1425 = vpop.permute.xlu0 %1424
    %1426 = vrot.lane.b32.xlu0 %v233, 32
    %v1427 = vpop.permute.xlu0 %1426
    %1428 = vrot.lane.b32.xlu0 %v239, 32
    %v1429 = vpop.permute.xlu0 %1428
    %1430 = vrot.lane.b32.xlu0 %v245, 32
    %v1431 = vpop.permute.xlu0 %1430
    %1432 = vrot.lane.b32.xlu0 %v229, 32
    %v1433 = vpop.permute.xlu0 %1432
    %1434 = vrot.lane.b32.xlu0 %v235, 32
    %v1435 = vpop.permute.xlu0 %1434
    %1436 = vrot.lane.b32.xlu0 %v241, 32
    %v1437 = vpop.permute.xlu0 %1436
    %1438 = vrot.lane.b32.xlu0 %v247, 32
    %v1439 = vpop.permute.xlu0 %1438
    %v1440 = vsel %vm334, %v1425, 0
    %v1442 = vsel %vm334, %v1427, 0
    %v1444 = vsel %vm334, %v1429, 0
    %v1446 = vsel %vm334, %v1431, 0
    %v1448 = vsel %vm334, %v1433, 0
    %v1450 = vsel %vm334, %v1435, 0
    %v1452 = vsel %vm334, %v1437, 0
    %v1454 = vsel %vm334, %v1439, 0
    %1456 = vmatprep.subr.mxu0 0.0
    %1457 = vmatpush1.xpose.msra.mxu0 0.0
    %1458 = vmatprep.subr.mxu0 0.0
    %1459 = vmatpush1.xpose.msra.mxu0 0.0
    %1460 = vmatprep.subr.mxu0 0.0
    %1461 = vmatpush1.xpose.msra.mxu0 0.0
    %1462 = vmatprep.subr.mxu0 0.0
    %1463 = vmatpush1.xpose.msra.mxu0 0.0
    %1464 = vmatprep.subr.mxu0 0.0
    %1465 = vmatpush1.xpose.msra.mxu0 0.0
    %1466 = vmatprep.subr.mxu0 0.0
    %1467 = vmatpush1.xpose.msra.mxu0 0.0
    %1468 = vmatprep.subr.mxu0 0.0
    %1469 = vmatpush1.xpose.msra.mxu0 0.0
    %1470 = vmatprep.subr.mxu0 0.0
    %1471 = vmatpush1.xpose.msra.mxu0 0.0
    %1472 = vmatprep.subr.mxu0 0.0
    %1473 = vmatpush1.xpose.msra.mxu0 0.0
    %1474 = vmatprep.subr.mxu0 0.0
    %1475 = vmatpush1.xpose.msra.mxu0 0.0
    %1476 = vmatprep.subr.mxu0 0.0
    %1477 = vmatpush1.xpose.msra.mxu0 0.0
    %1478 = vmatprep.subr.mxu0 0.0
    %1479 = vmatpush1.xpose.msra.mxu0 0.0
    %1480 = vmatprep.subr.mxu0 0.0
    %1481 = vmatpush1.xpose.msra.mxu0 %v1454
    %1482 = vmatprep.subr.mxu0 0.0
    %1483 = vmatpush1.xpose.msra.mxu0 %v1452
    %1484 = vmatprep.subr.mxu0 0.0
    %1485 = vmatpush1.xpose.msra.mxu0 %v1450
    %1486 = vmatprep.subr.mxu0 0.0
    %1487 = vmatpush1.xpose.msra.mxu0 %v1448
    %1488 = vmatprep.subr.mxu0 0.0
    %1489 = vmatpush2.xpose.msra.mxu0 0.0
    %1490 = vmatprep.subr.mxu0 0.0
    %1491 = vmatpush2.xpose.msra.mxu0 0.0
    %1492 = vmatprep.subr.mxu0 0.0
    %1493 = vmatpush2.xpose.msra.mxu0 0.0
    %1494 = vmatprep.subr.mxu0 0.0
    %1495 = vmatpush2.xpose.msra.mxu0 0.0
    %1496 = vmatprep.subr.mxu0 0.0
    %1497 = vmatpush2.xpose.msra.mxu0 0.0
    %1498 = vmatprep.subr.mxu0 0.0
    %1499 = vmatpush2.xpose.msra.mxu0 0.0
    %1500 = vmatprep.subr.mxu0 0.0
    %1501 = vmatpush2.xpose.msra.mxu0 0.0
    %1502 = vmatprep.subr.mxu0 0.0
    %1503 = vmatpush2.xpose.msra.mxu0 0.0
    %1504 = vmatprep.subr.mxu0 0.0
    %1505 = vmatpush2.xpose.msra.mxu0 0.0
    %1506 = vmatprep.subr.mxu0 0.0
    %1507 = vmatpush2.xpose.msra.mxu0 0.0
    %1508 = vmatprep.subr.mxu0 0.0
    %1509 = vmatpush2.xpose.msra.mxu0 0.0
    %1510 = vmatprep.subr.mxu0 0.0
    %1511 = vmatpush2.xpose.msra.mxu0 0.0
    %1512 = vmatprep.subr.mxu0 0.0
    %1513 = vmatpush2.xpose.msra.mxu0 0.0
    %1514 = vmatprep.subr.mxu0 0.0
    %1515 = vmatpush2.xpose.msra.mxu0 0.0
    %1516 = vmatprep.subr.mxu0 0.0
    %1517 = vmatpush2.xpose.msra.mxu0 0.0
    %1518 = vmatprep.subr.mxu0 0.0
    %1519 = vmatpush2.xpose.msra.mxu0 0.0
    %1520 = vmatprep.mubr.f32.mxu0 0.0
    %1521 = vmatmul.mubr.f32.gmra.mxu0 %v1440
    %v1522 = vpop.f32.mrf.mxu0
    %v1523 = vadd.f32 %v72, %v1522
    %v1524 = vpop.f32.mrf.mxu0
    %1525 = vmatprep.mubr.f32.mxu0 0.0
    %1526 = vmatmul.mubr.f32.gmra.mxu0 %v1442
    %v1527 = vpop.f32.mrf.mxu0
    %v1528 = vadd.f32 %v73, %v1527
    %v1529 = vpop.f32.mrf.mxu0
    %1530 = vmatprep.mubr.f32.mxu0 0.0
    %1531 = vmatmul.mubr.f32.gmra.mxu0 %v1444
    %v1532 = vpop.f32.mrf.mxu0
    %v1533 = vadd.f32 %v74, %v1532
    %v1534 = vpop.f32.mrf.mxu0
    %1535 = vmatprep.mubr.f32.mxu0 0.0
    %1536 = vmatmul.mubr.f32.gmra.mxu0 %v1446
    %v1537 = vpop.f32.mrf.mxu0
    %v1538 = vadd.f32 %v75, %v1537
    %v1539 = vpop.f32.mrf.mxu0
    %1540 = vdwg.mxu0
    %v1541 = vsel %vm334, %v1523, -inf
    %1542 = vmax.xlane.f32.xlu0 %v1541
    %v1543 = vpop.xlane.xlu0 %1542
    %v1544 = vsel %vm334, %v1528, -inf
    %1545 = vmax.xlane.f32.xlu0 %v1544
    %v1546 = vpop.xlane.xlu0 %1545
    %v1547 = vsel %vm334, %v1533, -inf
    %1548 = vmax.xlane.f32.xlu0 %v1547
    %v1549 = vpop.xlane.xlu0 %1548
    %v1550 = vsel %vm334, %v1538, -inf
    %1551 = vmax.xlane.f32.xlu0 %v1550
    %v1552 = vpop.xlane.xlu0 %1551
    %v1553 = vsub.f32 %v1523, %v1543
    %v1554 = vsub.f32 %v1528, %v1546
    %v1555 = vsub.f32 %v1533, %v1549
    %v1556 = vsub.f32 %v1538, %v1552
    %v1557 = vmul.f32 %v1553, 1.442695
    %v1558 = vpow.pop %v1557
    %v1559 = vmul.f32 %v1554, 1.442695
    %v1560 = vpow.pop %v1559
    %v1561 = vmul.f32 %v1555, 1.442695
    %v1562 = vpow.pop %v1561
    %v1563 = vmul.f32 %v1556, 1.442695
    %v1564 = vpow.pop %v1563
    %v1565 = vsel %vm334, %v1558, 0.0
    %1566 = vadd.xlane.f32.xlu0 %v1565
    %v1567 = vpop.xlane.xlu0 %1566
    %v1568 = vsel %vm334, %v1560, 0.0
    %1569 = vadd.xlane.f32.xlu0 %v1568
    %v1570 = vpop.xlane.xlu0 %1569
    %v1571 = vsel %vm334, %v1562, 0.0
    %1572 = vadd.xlane.f32.xlu0 %v1571
    %v1573 = vpop.xlane.xlu0 %1572
    %v1574 = vsel %vm334, %v1564, 0.0
    %1575 = vadd.xlane.f32.xlu0 %v1574
    %v1576 = vpop.xlane.xlu0 %1575
    %v1577 = vrcp.pop %v1567
    %v1578 = vrcp.pop %v1570
    %v1579 = vrcp.pop %v1573
    %v1580 = vrcp.pop %v1576
    %v1581 = vmul.f32 %v1558, %v1577
    %v1582 = vmul.f32 %v1560, %v1578
    %v1583 = vmul.f32 %v1562, %v1579
    %v1584 = vmul.f32 %v1564, %v1580
    %1585 = vrot.lane.b32.xlu0 %v316, 32
    %v1586 = vpop.permute.xlu0 %1585
    %1587 = vrot.lane.b32.xlu0 %v321, 32
    %v1588 = vpop.permute.xlu0 %1587
    %1589 = vrot.lane.b32.xlu0 %v326, 32
    %v1590 = vpop.permute.xlu0 %1589
    %1591 = vrot.lane.b32.xlu0 %v331, 32
    %v1592 = vpop.permute.xlu0 %1591
    %v1598 = vsel %vm334, %v1581, 0
    %v1601 = vsel %vm334, %v1582, 0
    %v1604 = vsel %vm334, %v1583, 0
    %v1607 = vsel %vm334, %v1584, 0
    %1609 = vmatprep.subr.mxu0 0.0
    %1610 = vmatpush1.msra.mxu0 0.0
    %1611 = vmatprep.subr.mxu0 0.0
    %1612 = vmatpush1.msra.mxu0 0.0
    %1613 = vmatprep.subr.mxu0 0.0
    %1614 = vmatpush1.msra.mxu0 0.0
    %1615 = vmatprep.subr.mxu0 0.0
    %1616 = vmatpush1.msra.mxu0 0.0
    %1617 = vmatprep.subr.mxu0 0.0
    %1618 = vmatpush1.msra.mxu0 0.0
    %1619 = vmatprep.subr.mxu0 0.0
    %1620 = vmatpush1.msra.mxu0 0.0
    %1621 = vmatprep.subr.mxu0 0.0
    %1622 = vmatpush1.msra.mxu0 0.0
    %1623 = vmatprep.subr.mxu0 0.0
    %1624 = vmatpush1.msra.mxu0 0.0
    %1625 = vmatprep.subr.mxu0 0.0
    %1626 = vmatpush1.msra.mxu0 0.0
    %1627 = vmatprep.subr.mxu0 0.0
    %1628 = vmatpush1.msra.mxu0 0.0
    %1629 = vmatprep.subr.mxu0 0.0
    %1630 = vmatpush1.msra.mxu0 0.0
    %1631 = vmatprep.subr.mxu0 0.0
    %1632 = vmatpush1.msra.mxu0 0.0
    %1633 = vmatprep.subr.mxu0 0.0
    %1634 = vmatpush1.msra.mxu0 %v1592
    %1635 = vmatprep.subr.mxu0 0.0
    %1636 = vmatpush1.msra.mxu0 %v1590
    %1637 = vmatprep.subr.mxu0 0.0
    %1638 = vmatpush1.msra.mxu0 %v1588
    %1639 = vmatprep.subr.mxu0 0.0
    %1640 = vmatpush1.msra.mxu0 %v1586
    %1641 = vmatprep.subr.mxu0 0.0
    %1642 = vmatpush2.msra.mxu0 0.0
    %1643 = vmatprep.subr.mxu0 0.0
    %1644 = vmatpush2.msra.mxu0 0.0
    %1645 = vmatprep.subr.mxu0 0.0
    %1646 = vmatpush2.msra.mxu0 0.0
    %1647 = vmatprep.subr.mxu0 0.0
    %1648 = vmatpush2.msra.mxu0 0.0
    %1649 = vmatprep.subr.mxu0 0.0
    %1650 = vmatpush2.msra.mxu0 0.0
    %1651 = vmatprep.subr.mxu0 0.0
    %1652 = vmatpush2.msra.mxu0 0.0
    %1653 = vmatprep.subr.mxu0 0.0
    %1654 = vmatpush2.msra.mxu0 0.0
    %1655 = vmatprep.subr.mxu0 0.0
    %1656 = vmatpush2.msra.mxu0 0.0
    %1657 = vmatprep.subr.mxu0 0.0
    %1658 = vmatpush2.msra.mxu0 0.0
    %1659 = vmatprep.subr.mxu0 0.0
    %1660 = vmatpush2.msra.mxu0 0.0
    %1661 = vmatprep.subr.mxu0 0.0
    %1662 = vmatpush2.msra.mxu0 0.0
    %1663 = vmatprep.subr.mxu0 0.0
    %1664 = vmatpush2.msra.mxu0 0.0
    %1665 = vmatprep.subr.mxu0 0.0
    %1666 = vmatpush2.msra.mxu0 0.0
    %1667 = vmatprep.subr.mxu0 0.0
    %1668 = vmatpush2.msra.mxu0 0.0
    %1669 = vmatprep.subr.mxu0 0.0
    %1670 = vmatpush2.msra.mxu0 0.0
    %1671 = vmatprep.subr.mxu0 0.0
    %1672 = vmatpush2.msra.mxu0 0.0
    %1673 = vmatprep.mubr.f32.mxu0 0.0
    %1674 = vmatmul.mubr.f32.gmra.mxu0 %v1598
    %v1675 = vpop.f32.mrf.mxu0
    %v1676 = vadd.f32 0.0, %v1675
    %v1677 = vpop.f32.mrf.mxu0
    %1678 = vmatprep.mubr.f32.mxu0 0.0
    %1679 = vmatmul.mubr.f32.gmra.mxu0 %v1601
    %v1680 = vpop.f32.mrf.mxu0
    %v1681 = vadd.f32 0.0, %v1680
    %v1682 = vpop.f32.mrf.mxu0
    %1683 = vmatprep.mubr.f32.mxu0 0.0
    %1684 = vmatmul.mubr.f32.gmra.mxu0 %v1604
    %v1685 = vpop.f32.mrf.mxu0
    %v1686 = vadd.f32 0.0, %v1685
    %v1687 = vpop.f32.mrf.mxu0
    %1688 = vmatprep.mubr.f32.mxu0 0.0
    %1689 = vmatmul.mubr.f32.gmra.mxu0 %v1607
    %v1690 = vpop.f32.mrf.mxu0
    %v1691 = vadd.f32 0.0, %v1690
    %v1692 = vpop.f32.mrf.mxu0
    %1693 = vdwg.mxu0
    %v1695 = vsel %vm334, %v1676, 0
    %v1698 = vsel %vm334, %v1681, 0
    %v1701 = vsel %vm334, %v1686, 0
    %v1704 = vsel %vm334, %v1691, 0
    %1706 = vmatprep.subr.mxu0 0.0
    %1707 = vmatpush1.msra.mxu0 0.0
    %1708 = vmatprep.subr.mxu0 0.0
    %1709 = vmatpush1.msra.mxu0 0.0
    %1710 = vmatprep.subr.mxu0 0.0
    %1711 = vmatpush1.msra.mxu0 0.0
    %1712 = vmatprep.subr.mxu0 0.0
    %1713 = vmatpush1.msra.mxu0 0.0
    %1714 = vmatprep.subr.mxu0 0.0
    %1715 = vmatpush1.msra.mxu0 0.0
    %1716 = vmatprep.subr.mxu0 0.0
    %1717 = vmatpush1.msra.mxu0 0.0
    %1718 = vmatprep.subr.mxu0 0.0
    %1719 = vmatpush1.msra.mxu0 0.0
    %1720 = vmatprep.subr.mxu0 0.0
    %1721 = vmatpush1.msra.mxu0 0.0
    %1722 = vmatprep.subr.mxu0 0.0
    %1723 = vmatpush1.msra.mxu0 0.0
    %1724 = vmatprep.subr.mxu0 0.0
    %1725 = vmatpush1.msra.mxu0 0.0
    %1726 = vmatprep.subr.mxu0 0.0
    %1727 = vmatpush1.msra.mxu0 0.0
    %1728 = vmatprep.subr.mxu0 0.0
    %1729 = vmatpush1.msra.mxu0 0.0
    %1730 = vmatprep.subr.mxu0 0.0
    %1731 = vmatpush1.msra.mxu0 %v143
    %1732 = vmatprep.subr.mxu0 0.0
    %1733 = vmatpush1.msra.mxu0 %v139
    %1734 = vmatprep.subr.mxu0 0.0
    %1735 = vmatpush1.msra.mxu0 %v135
    %1736 = vmatprep.subr.mxu0 0.0
    %1737 = vmatpush1.msra.mxu0 %v131
    %1738 = vmatprep.subr.mxu0 0.0
    %1739 = vmatpush2.msra.mxu0 0.0
    %1740 = vmatprep.subr.mxu0 0.0
    %1741 = vmatpush2.msra.mxu0 0.0
    %1742 = vmatprep.subr.mxu0 0.0
    %1743 = vmatpush2.msra.mxu0 0.0
    %1744 = vmatprep.subr.mxu0 0.0
    %1745 = vmatpush2.msra.mxu0 0.0
    %1746 = vmatprep.subr.mxu0 0.0
    %1747 = vmatpush2.msra.mxu0 0.0
    %1748 = vmatprep.subr.mxu0 0.0
    %1749 = vmatpush2.msra.mxu0 0.0
    %1750 = vmatprep.subr.mxu0 0.0
    %1751 = vmatpush2.msra.mxu0 0.0
    %1752 = vmatprep.subr.mxu0 0.0
    %1753 = vmatpush2.msra.mxu0 0.0
    %1754 = vmatprep.subr.mxu0 0.0
    %1755 = vmatpush2.msra.mxu0 0.0
    %1756 = vmatprep.subr.mxu0 0.0
    %1757 = vmatpush2.msra.mxu0 0.0
    %1758 = vmatprep.subr.mxu0 0.0
    %1759 = vmatpush2.msra.mxu0 0.0
    %1760 = vmatprep.subr.mxu0 0.0
    %1761 = vmatpush2.msra.mxu0 0.0
    %1762 = vmatprep.subr.mxu0 0.0
    %1763 = vmatpush2.msra.mxu0 0.0
    %1764 = vmatprep.subr.mxu0 0.0
    %1765 = vmatpush2.msra.mxu0 0.0
    %1766 = vmatprep.subr.mxu0 0.0
    %1767 = vmatpush2.msra.mxu0 0.0
    %1768 = vmatprep.subr.mxu0 0.0
    %1769 = vmatpush2.msra.mxu0 0.0
    %1770 = vmatprep.mubr.f32.mxu0 0.0
    %1771 = vmatmul.mubr.f32.gmra.mxu0 %v1695
    %v1772 = vpop.f32.mrf.mxu0
    %v1773 = vadd.f32 0.0, %v1772
    %v1774 = vpop.f32.mrf.mxu0
    %1775 = vmatprep.mubr.f32.mxu0 0.0
    %1776 = vmatmul.mubr.f32.gmra.mxu0 %v1698
    %v1777 = vpop.f32.mrf.mxu0
    %v1778 = vadd.f32 0.0, %v1777
    %v1779 = vpop.f32.mrf.mxu0
    %1780 = vmatprep.mubr.f32.mxu0 0.0
    %1781 = vmatmul.mubr.f32.gmra.mxu0 %v1701
    %v1782 = vpop.f32.mrf.mxu0
    %v1783 = vadd.f32 0.0, %v1782
    %v1784 = vpop.f32.mrf.mxu0
    %1785 = vmatprep.mubr.f32.mxu0 0.0
    %1786 = vmatmul.mubr.f32.gmra.mxu0 %v1704
    %v1787 = vpop.f32.mrf.mxu0
    %v1788 = vadd.f32 0.0, %v1787
    %v1789 = vpop.f32.mrf.mxu0
    %1790 = vdwg.mxu0
    %v1791 = vadd.f32 %v1420, %v1773
    %v1792 = vadd.f32 %v1421, %v1778
    %v1793 = vadd.f32 %v1422, %v1783
    %v1794 = vadd.f32 %v1423, %v1788
    %v1795 = vlaneseq
    %v1796 = vshrl.u32 %v1795, 7
    %v1797 = vsub.s32 0, %v1796
    %v1798 = vrot.slane %v147, %v1797
    %v1799 = vadd.f32 %v1791, %v1798
    %v1800 = vadd.f32 %v1792, %v1798
    %v1801 = vadd.f32 %v1793, %v1798
    %v1802 = vadd.f32 %v1794, %v1798
    %v1803 = vadd.f32 %v68, %v1799
    %v1804 = vadd.f32 %v69, %v1800
    %v1805 = vadd.f32 %v70, %v1801
    %v1806 = vadd.f32 %v71, %v1802
    %1807 = vadd.xlane.f32.xlu0 %v1803
    %v1808 = vpop.xlane.xlu0 %1807
    %1809 = vadd.xlane.f32.xlu0 %v1804
    %v1810 = vpop.xlane.xlu0 %1809
    %1811 = vadd.xlane.f32.xlu0 %v1805
    %v1812 = vpop.xlane.xlu0 %1811
    %1813 = vadd.xlane.f32.xlu0 %v1806
    %v1814 = vpop.xlane.xlu0 %1813
    %v1815 = vmul.f32 %v1808, 0.0078125
    %v1816 = vmul.f32 %v1810, 0.0078125
    %v1817 = vmul.f32 %v1812, 0.0078125
    %v1818 = vmul.f32 %v1814, 0.0078125
    %v1819 = vmul.f32 %v1803, %v1803
    %v1820 = vmul.f32 %v1804, %v1804
    %v1821 = vmul.f32 %v1805, %v1805
    %v1822 = vmul.f32 %v1806, %v1806
    %1823 = vadd.xlane.f32.xlu0 %v1819
    %v1824 = vpop.xlane.xlu0 %1823
    %1825 = vadd.xlane.f32.xlu0 %v1820
    %v1826 = vpop.xlane.xlu0 %1825
    %1827 = vadd.xlane.f32.xlu0 %v1821
    %v1828 = vpop.xlane.xlu0 %1827
    %1829 = vadd.xlane.f32.xlu0 %v1822
    %v1830 = vpop.xlane.xlu0 %1829
    %v1831 = vmul.f32 %v1824, 0.0078125
    %v1832 = vmul.f32 %v1826, 0.0078125
    %v1833 = vmul.f32 %v1828, 0.0078125
    %v1834 = vmul.f32 %v1830, 0.0078125
    %v1835 = vmul.f32 %v1815, %v1815
    %v1836 = vmul.f32 %v1816, %v1816
    %v1837 = vmul.f32 %v1817, %v1817
    %v1838 = vmul.f32 %v1818, %v1818
    %v1839 = vsub.f32 %v1831, %v1835
    %v1840 = vsub.f32 %v1832, %v1836
    %v1841 = vsub.f32 %v1833, %v1837
    %v1842 = vsub.f32 %v1834, %v1838
    %v1843 = vsub.f32 %v1803, %v1815
    %v1844 = vsub.f32 %v1804, %v1816
    %v1845 = vsub.f32 %v1805, %v1817
    %v1846 = vsub.f32 %v1806, %v1818
    %v1847 = vadd.f32 %v1839, 1e-05
    %v1848 = vadd.f32 %v1840, 1e-05
    %v1849 = vadd.f32 %v1841, 1e-05
    %v1850 = vadd.f32 %v1842, 1e-05
    %v1851 = vrsqrt.pop %v1847
    %v1852 = vrsqrt.pop %v1848
    %v1853 = vrsqrt.pop %v1849
    %v1854 = vrsqrt.pop %v1850
    %v1855 = vmul.f32 %v1843, %v1851
    %v1856 = vmul.f32 %v1844, %v1852
    %v1857 = vmul.f32 %v1845, %v1853
    %v1858 = vmul.f32 %v1846, %v1854
    %v1859 = vlaneseq
    %v1860 = vshrl.u32 %v1859, 7
    %v1861 = vsub.s32 3, %v1860
    %v1862 = vrot.slane %v144, %v1861
    %v1863 = vmul.f32 %v1855, %v1862
    %v1864 = vmul.f32 %v1856, %v1862
    %v1865 = vmul.f32 %v1857, %v1862
    %v1866 = vmul.f32 %v1858, %v1862
    %v1867 = vlaneseq
    %v1868 = vshrl.u32 %v1867, 7
    %v1869 = vsub.s32 4, %v1868
    %v1870 = vrot.slane %v144, %v1869
    %v1871 = vadd.f32 %v1863, %v1870
    %v1872 = vadd.f32 %v1864, %v1870
    %v1873 = vadd.f32 %v1865, %v1870
    %v1874 = vadd.f32 %v1866, %v1870
    %v1875 = vld [vmem:[#allocation5] sm:$0xff]
    %v1876 = vld [vmem:[#allocation5 + $0x8] sm:$0xff]
    %v1877 = vld [vmem:[#allocation5 + $0x10] sm:$0xff]
    %v1878 = vld [vmem:[#allocation5 + $0x18] sm:$0xff]
    %v1879 = vld [vmem:[#allocation5 + $0x20] sm:$0xff]
    %v1880 = vld [vmem:[#allocation5 + $0x28] sm:$0xff]
    %v1881 = vld [vmem:[#allocation5 + $0x30] sm:$0xff]
    %v1882 = vld [vmem:[#allocation5 + $0x38] sm:$0xff]
    %v1883 = vld [vmem:[#allocation5 + $0x40] sm:$0xff]
    %v1884 = vld [vmem:[#allocation5 + $0x48] sm:$0xff]
    %v1885 = vld [vmem:[#allocation5 + $0x50] sm:$0xff]
    %v1886 = vld [vmem:[#allocation5 + $0x58] sm:$0xff]
    %v1887 = vld [vmem:[#allocation5 + $0x60] sm:$0xff]
    %v1888 = vld [vmem:[#allocation5 + $0x68] sm:$0xff]
    %v1889 = vld [vmem:[#allocation5 + $0x70] sm:$0xff]
    %v1890 = vld [vmem:[#allocation5 + $0x78] sm:$0xff]
    %v1891 = vld [vmem:[#allocation5 + $0x80] sm:$0xff]
    %v1892 = vld [vmem:[#allocation5 + $0x88] sm:$0xff]
    %v1893 = vld [vmem:[#allocation5 + $0x90] sm:$0xff]
    %v1894 = vld [vmem:[#allocation5 + $0x98] sm:$0xff]
    %v1895 = vld [vmem:[#allocation5 + $0xa0] sm:$0xff]
    %v1896 = vld [vmem:[#allocation5 + $0xa8] sm:$0xff]
    %v1897 = vld [vmem:[#allocation5 + $0xb0] sm:$0xff]
    %v1898 = vld [vmem:[#allocation5 + $0xb8] sm:$0xff]
    %v1899 = vld [vmem:[#allocation5 + $0xc0] sm:$0xff]
    %v1900 = vld [vmem:[#allocation5 + $0xc8] sm:$0xff]
    %v1901 = vld [vmem:[#allocation5 + $0xd0] sm:$0xff]
    %v1902 = vld [vmem:[#allocation5 + $0xd8] sm:$0xff]
    %v1903 = vld [vmem:[#allocation5 + $0xe0] sm:$0xff]
    %v1904 = vld [vmem:[#allocation5 + $0xe8] sm:$0xff]
    %v1905 = vld [vmem:[#allocation5 + $0xf0] sm:$0xff]
    %v1906 = vld [vmem:[#allocation5 + $0xf8] sm:$0xff]
    %v1907 = vlaneseq
    %v1908 = vshrl.u32 %v1907, 7
    %v1909 = vsub.s32 1, %v1908
    %v1910 = vrot.slane %v144, %v1909
    %v1911 = vlaneseq
    %v1912 = vshrl.u32 %v1911, 7
    %v1913 = vsub.s32 1, %v1912
    %v1914 = vrot.slane %v145, %v1913
    %1915 = vmatprep.subr.mxu0 %v1906
    %1916 = vmatpush1.msra.mxu0 %v1905
    %1917 = vmatprep.subr.mxu0 %v1904
    %1918 = vmatpush1.msra.mxu0 %v1903
    %1919 = vmatprep.subr.mxu0 %v1902
    %1920 = vmatpush1.msra.mxu0 %v1901
    %1921 = vmatprep.subr.mxu0 %v1900
    %1922 = vmatpush1.msra.mxu0 %v1899
    %1923 = vmatprep.subr.mxu0 %v1898
    %1924 = vmatpush1.msra.mxu0 %v1897
    %1925 = vmatprep.subr.mxu0 %v1896
    %1926 = vmatpush1.msra.mxu0 %v1895
    %1927 = vmatprep.subr.mxu0 %v1894
    %1928 = vmatpush1.msra.mxu0 %v1893
    %1929 = vmatprep.subr.mxu0 %v1892
    %1930 = vmatpush1.msra.mxu0 %v1891
    %1931 = vmatprep.subr.mxu0 %v1890
    %1932 = vmatpush1.msra.mxu0 %v1889
    %1933 = vmatprep.subr.mxu0 %v1888
    %1934 = vmatpush1.msra.mxu0 %v1887
    %1935 = vmatprep.subr.mxu0 %v1886
    %1936 = vmatpush1.msra.mxu0 %v1885
    %1937 = vmatprep.subr.mxu0 %v1884
    %1938 = vmatpush1.msra.mxu0 %v1883
    %1939 = vmatprep.subr.mxu0 %v1882
    %1940 = vmatpush1.msra.mxu0 %v1881
    %1941 = vmatprep.subr.mxu0 %v1880
    %1942 = vmatpush1.msra.mxu0 %v1879
    %1943 = vmatprep.subr.mxu0 %v1878
    %1944 = vmatpush1.msra.mxu0 %v1877
    %1945 = vmatprep.subr.mxu0 %v1876
    %1946 = vmatpush1.msra.mxu0 %v1875
    %1947 = vmatprep.subr.mxu0 0.0
    %1948 = vmatpush2.msra.mxu0 0.0
    %1949 = vmatprep.subr.mxu0 0.0
    %1950 = vmatpush2.msra.mxu0 0.0
    %1951 = vmatprep.subr.mxu0 0.0
    %1952 = vmatpush2.msra.mxu0 0.0
    %1953 = vmatprep.subr.mxu0 0.0
    %1954 = vmatpush2.msra.mxu0 0.0
    %1955 = vmatprep.subr.mxu0 0.0
    %1956 = vmatpush2.msra.mxu0 0.0
    %1957 = vmatprep.subr.mxu0 0.0
    %1958 = vmatpush2.msra.mxu0 0.0
    %1959 = vmatprep.subr.mxu0 0.0
    %1960 = vmatpush2.msra.mxu0 0.0
    %1961 = vmatprep.subr.mxu0 0.0
    %1962 = vmatpush2.msra.mxu0 0.0
    %1963 = vmatprep.subr.mxu0 0.0
    %1964 = vmatpush2.msra.mxu0 0.0
    %1965 = vmatprep.subr.mxu0 0.0
    %1966 = vmatpush2.msra.mxu0 0.0
    %1967 = vmatprep.subr.mxu0 0.0
    %1968 = vmatpush2.msra.mxu0 0.0
    %1969 = vmatprep.subr.mxu0 0.0
    %1970 = vmatpush2.msra.mxu0 0.0
    %1971 = vmatprep.subr.mxu0 0.0
    %1972 = vmatpush2.msra.mxu0 0.0
    %1973 = vmatprep.subr.mxu0 0.0
    %1974 = vmatpush2.msra.mxu0 0.0
    %1975 = vmatprep.subr.mxu0 0.0
    %1976 = vmatpush2.msra.mxu0 0.0
    %1977 = vmatprep.subr.mxu0 0.0
    %1978 = vmatpush2.msra.mxu0 0.0
    %1979 = vmatprep.mubr.f32.mxu0 0.0
    %1980 = vmatmul.mubr.f32.gmra.mxu0 %v1871
    %v1981 = vpop.f32.mrf.mxu0
    %v1982 = vadd.f32 %v1910, %v1981
    %v1983 = vpop.f32.mrf.mxu0
    %v1984 = vadd.f32 %v1914, %v1983
    %1985 = vmatprep.mubr.f32.mxu0 0.0
    %1986 = vmatmul.mubr.f32.gmra.mxu0 %v1872
    %v1987 = vpop.f32.mrf.mxu0
    %v1988 = vadd.f32 %v1910, %v1987
    %v1989 = vpop.f32.mrf.mxu0
    %v1990 = vadd.f32 %v1914, %v1989
    %1991 = vmatprep.mubr.f32.mxu0 0.0
    %1992 = vmatmul.mubr.f32.gmra.mxu0 %v1873
    %v1993 = vpop.f32.mrf.mxu0
    %v1994 = vadd.f32 %v1910, %v1993
    %v1995 = vpop.f32.mrf.mxu0
    %v1996 = vadd.f32 %v1914, %v1995
    %1997 = vmatprep.mubr.f32.mxu0 0.0
    %1998 = vmatmul.mubr.f32.gmra.mxu0 %v1874
    %v1999 = vpop.f32.mrf.mxu0
    %v2000 = vadd.f32 %v1910, %v1999
    %v2001 = vpop.f32.mrf.mxu0
    %v2002 = vadd.f32 %v1914, %v2001
    %2003 = vdwg.mxu0
    %v2004 = vmax.f32 %v1982, 0.0
    %v2005 = vmax.f32 %v1984, 0.0
    %v2006 = vmax.f32 %v1988, 0.0
    %v2007 = vmax.f32 %v1990, 0.0
    %v2008 = vmax.f32 %v1994, 0.0
    %v2009 = vmax.f32 %v1996, 0.0
    %v2010 = vmax.f32 %v2000, 0.0
    %v2011 = vmax.f32 %v2002, 0.0
    %v2012 = vld [vmem:[#allocation7] sm:$0xff]
    %v2013 = vld [vmem:[#allocation7 + $0x8] sm:$0xff]
    %v2014 = vld [vmem:[#allocation7 + $0x10] sm:$0xff]
    %v2015 = vld [vmem:[#allocation7 + $0x18] sm:$0xff]
    %v2016 = vld [vmem:[#allocation7 + $0x20] sm:$0xff]
    %v2017 = vld [vmem:[#allocation7 + $0x28] sm:$0xff]
    %v2018 = vld [vmem:[#allocation7 + $0x30] sm:$0xff]
    %v2019 = vld [vmem:[#allocation7 + $0x38] sm:$0xff]
    %v2020 = vld [vmem:[#allocation7 + $0x40] sm:$0xff]
    %v2021 = vld [vmem:[#allocation7 + $0x48] sm:$0xff]
    %v2022 = vld [vmem:[#allocation7 + $0x50] sm:$0xff]
    %v2023 = vld [vmem:[#allocation7 + $0x58] sm:$0xff]
    %v2024 = vld [vmem:[#allocation7 + $0x60] sm:$0xff]
    %v2025 = vld [vmem:[#allocation7 + $0x68] sm:$0xff]
    %v2026 = vld [vmem:[#allocation7 + $0x70] sm:$0xff]
    %v2027 = vld [vmem:[#allocation7 + $0x78] sm:$0xff]
    %v2028 = vld [vmem:[#allocation7 + $0x80] sm:$0xff]
    %v2029 = vld [vmem:[#allocation7 + $0x88] sm:$0xff]
    %v2030 = vld [vmem:[#allocation7 + $0x90] sm:$0xff]
    %v2031 = vld [vmem:[#allocation7 + $0x98] sm:$0xff]
    %v2032 = vld [vmem:[#allocation7 + $0xa0] sm:$0xff]
    %v2033 = vld [vmem:[#allocation7 + $0xa8] sm:$0xff]
    %v2034 = vld [vmem:[#allocation7 + $0xb0] sm:$0xff]
    %v2035 = vld [vmem:[#allocation7 + $0xb8] sm:$0xff]
    %v2036 = vld [vmem:[#allocation7 + $0xc0] sm:$0xff]
    %v2037 = vld [vmem:[#allocation7 + $0xc8] sm:$0xff]
    %v2038 = vld [vmem:[#allocation7 + $0xd0] sm:$0xff]
    %v2039 = vld [vmem:[#allocation7 + $0xd8] sm:$0xff]
    %v2040 = vld [vmem:[#allocation7 + $0xe0] sm:$0xff]
    %v2041 = vld [vmem:[#allocation7 + $0xe8] sm:$0xff]
    %v2042 = vld [vmem:[#allocation7 + $0xf0] sm:$0xff]
    %v2043 = vld [vmem:[#allocation7 + $0xf8] sm:$0xff]
    %v2044 = vlaneseq
    %v2045 = vshrl.u32 %v2044, 7
    %v2046 = vsub.s32 2, %v2045
    %v2047 = vrot.slane %v144, %v2046
    %2048 = vmatprep.subr.mxu0 0.0
    %2049 = vmatpush1.msra.mxu0 %v2027
    %2050 = vmatprep.subr.mxu0 0.0
    %2051 = vmatpush1.msra.mxu0 %v2026
    %2052 = vmatprep.subr.mxu0 0.0
    %2053 = vmatpush1.msra.mxu0 %v2025
    %2054 = vmatprep.subr.mxu0 0.0
    %2055 = vmatpush1.msra.mxu0 %v2024
    %2056 = vmatprep.subr.mxu0 0.0
    %2057 = vmatpush1.msra.mxu0 %v2023
    %2058 = vmatprep.subr.mxu0 0.0
    %2059 = vmatpush1.msra.mxu0 %v2022
    %2060 = vmatprep.subr.mxu0 0.0
    %2061 = vmatpush1.msra.mxu0 %v2021
    %2062 = vmatprep.subr.mxu0 0.0
    %2063 = vmatpush1.msra.mxu0 %v2020
    %2064 = vmatprep.subr.mxu0 0.0
    %2065 = vmatpush1.msra.mxu0 %v2019
    %2066 = vmatprep.subr.mxu0 0.0
    %2067 = vmatpush1.msra.mxu0 %v2018
    %2068 = vmatprep.subr.mxu0 0.0
    %2069 = vmatpush1.msra.mxu0 %v2017
    %2070 = vmatprep.subr.mxu0 0.0
    %2071 = vmatpush1.msra.mxu0 %v2016
    %2072 = vmatprep.subr.mxu0 0.0
    %2073 = vmatpush1.msra.mxu0 %v2015
    %2074 = vmatprep.subr.mxu0 0.0
    %2075 = vmatpush1.msra.mxu0 %v2014
    %2076 = vmatprep.subr.mxu0 0.0
    %2077 = vmatpush1.msra.mxu0 %v2013
    %2078 = vmatprep.subr.mxu0 0.0
    %2079 = vmatpush1.msra.mxu0 %v2012
    %2080 = vmatprep.subr.mxu0 0.0
    %2081 = vmatpush2.msra.mxu0 %v2043
    %2082 = vmatprep.subr.mxu0 0.0
    %2083 = vmatpush2.msra.mxu0 %v2042
    %2084 = vmatprep.subr.mxu0 0.0
    %2085 = vmatpush2.msra.mxu0 %v2041
    %2086 = vmatprep.subr.mxu0 0.0
    %2087 = vmatpush2.msra.mxu0 %v2040
    %2088 = vmatprep.subr.mxu0 0.0
    %2089 = vmatpush2.msra.mxu0 %v2039
    %2090 = vmatprep.subr.mxu0 0.0
    %2091 = vmatpush2.msra.mxu0 %v2038
    %2092 = vmatprep.subr.mxu0 0.0
    %2093 = vmatpush2.msra.mxu0 %v2037
    %2094 = vmatprep.subr.mxu0 0.0
    %2095 = vmatpush2.msra.mxu0 %v2036
    %2096 = vmatprep.subr.mxu0 0.0
    %2097 = vmatpush2.msra.mxu0 %v2035
    %2098 = vmatprep.subr.mxu0 0.0
    %2099 = vmatpush2.msra.mxu0 %v2034
    %2100 = vmatprep.subr.mxu0 0.0
    %2101 = vmatpush2.msra.mxu0 %v2033
    %2102 = vmatprep.subr.mxu0 0.0
    %2103 = vmatpush2.msra.mxu0 %v2032
    %2104 = vmatprep.subr.mxu0 0.0
    %2105 = vmatpush2.msra.mxu0 %v2031
    %2106 = vmatprep.subr.mxu0 0.0
    %2107 = vmatpush2.msra.mxu0 %v2030
    %2108 = vmatprep.subr.mxu0 0.0
    %2109 = vmatpush2.msra.mxu0 %v2029
    %2110 = vmatprep.subr.mxu0 0.0
    %2111 = vmatpush2.msra.mxu0 %v2028
    %2112 = vmatprep.mubr.f32.mxu0 %v2005
    %2113 = vmatmul.mubr.f32.gmra.mxu0 %v2004
    %v2114 = vpop.f32.mrf.mxu0
    %v2115 = vadd.f32 %v2047, %v2114
    %v2116 = vpop.f32.mrf.mxu0
    %2117 = vmatprep.mubr.f32.mxu0 %v2007
    %2118 = vmatmul.mubr.f32.gmra.mxu0 %v2006
    %v2119 = vpop.f32.mrf.mxu0
    %v2120 = vadd.f32 %v2047, %v2119
    %v2121 = vpop.f32.mrf.mxu0
    %2122 = vmatprep.mubr.f32.mxu0 %v2009
    %2123 = vmatmul.mubr.f32.gmra.mxu0 %v2008
    %v2124 = vpop.f32.mrf.mxu0
    %v2125 = vadd.f32 %v2047, %v2124
    %v2126 = vpop.f32.mrf.mxu0
    %2127 = vmatprep.mubr.f32.mxu0 %v2011
    %2128 = vmatmul.mubr.f32.gmra.mxu0 %v2010
    %v2129 = vpop.f32.mrf.mxu0
    %v2130 = vadd.f32 %v2047, %v2129
    %v2131 = vpop.f32.mrf.mxu0
    %2132 = vdwg.mxu0
    %v2133 = vadd.f32 %v1871, %v2115
    %v2134 = vadd.f32 %v1872, %v2120
    %v2135 = vadd.f32 %v1873, %v2125
    %v2136 = vadd.f32 %v1874, %v2130
    %2137 = vadd.xlane.f32.xlu0 %v2133
    %v2138 = vpop.xlane.xlu0 %2137
    %2139 = vadd.xlane.f32.xlu0 %v2134
    %v2140 = vpop.xlane.xlu0 %2139
    %2141 = vadd.xlane.f32.xlu0 %v2135
    %v2142 = vpop.xlane.xlu0 %2141
    %2143 = vadd.xlane.f32.xlu0 %v2136
    %v2144 = vpop.xlane.xlu0 %2143
    %v2145 = vmul.f32 %v2138, 0.0078125
    %v2146 = vmul.f32 %v2140, 0.0078125
    %v2147 = vmul.f32 %v2142, 0.0078125
    %v2148 = vmul.f32 %v2144, 0.0078125
    %v2149 = vmul.f32 %v2133, %v2133
    %v2150 = vmul.f32 %v2134, %v2134
    %v2151 = vmul.f32 %v2135, %v2135
    %v2152 = vmul.f32 %v2136, %v2136
    %2153 = vadd.xlane.f32.xlu0 %v2149
    %v2154 = vpop.xlane.xlu0 %2153
    %2155 = vadd.xlane.f32.xlu0 %v2150
    %v2156 = vpop.xlane.xlu0 %2155
    %2157 = vadd.xlane.f32.xlu0 %v2151
    %v2158 = vpop.xlane.xlu0 %2157
    %2159 = vadd.xlane.f32.xlu0 %v2152
    %v2160 = vpop.xlane.xlu0 %2159
    %v2161 = vmul.f32 %v2154, 0.0078125
    %v2162 = vmul.f32 %v2156, 0.0078125
    %v2163 = vmul.f32 %v2158, 0.0078125
    %v2164 = vmul.f32 %v2160, 0.0078125
    %v2165 = vmul.f32 %v2145, %v2145
    %v2166 = vmul.f32 %v2146, %v2146
    %v2167 = vmul.f32 %v2147, %v2147
    %v2168 = vmul.f32 %v2148, %v2148
    %v2169 = vsub.f32 %v2161, %v2165
    %v2170 = vsub.f32 %v2162, %v2166
    %v2171 = vsub.f32 %v2163, %v2167
    %v2172 = vsub.f32 %v2164, %v2168
    %v2173 = vsub.f32 %v2133, %v2145
    %v2174 = vsub.f32 %v2134, %v2146
    %v2175 = vsub.f32 %v2135, %v2147
    %v2176 = vsub.f32 %v2136, %v2148
    %v2177 = vadd.f32 %v2169, 1e-05
    %v2178 = vadd.f32 %v2170, 1e-05
    %v2179 = vadd.f32 %v2171, 1e-05
    %v2180 = vadd.f32 %v2172, 1e-05
    %v2181 = vrsqrt.pop %v2177
    %v2182 = vrsqrt.pop %v2178
    %v2183 = vrsqrt.pop %v2179
    %v2184 = vrsqrt.pop %v2180
    %v2185 = vmul.f32 %v2173, %v2181
    %v2186 = vmul.f32 %v2174, %v2182
    %v2187 = vmul.f32 %v2175, %v2183
    %v2188 = vmul.f32 %v2176, %v2184
    %v2189 = vlaneseq
    %v2190 = vshrl.u32 %v2189, 7
    %v2191 = vsub.s32 5, %v2190
    %v2192 = vrot.slane %v144, %v2191
    %v2193 = vmul.f32 %v2185, %v2192
    %v2194 = vmul.f32 %v2186, %v2192
    %v2195 = vmul.f32 %v2187, %v2192
    %v2196 = vmul.f32 %v2188, %v2192
    %v2197 = vlaneseq
    %v2198 = vshrl.u32 %v2197, 7
    %v2199 = vsub.s32 6, %v2198
    %v2200 = vrot.slane %v144, %v2199
    %v2201 = vadd.f32 %v2193, %v2200
    %v2202 = vadd.f32 %v2194, %v2200
    %v2203 = vadd.f32 %v2195, %v2200
    %v2204 = vadd.f32 %v2196, %v2200
    %v2205 = vmul.f32 %v2201, %v76
    %v2206 = vmul.f32 %v2202, %v77
    %v2207 = vmul.f32 %v2203, %v78
    %v2208 = vmul.f32 %v2204, %v79
    %2209 = vst [vmem:[#allocation8] sm:$0xff] %v2205
    %2210 = vst [vmem:[#allocation8 + $0x8] sm:$0xff] %v2206
    %2211 = vst [vmem:[#allocation8 + $0x10] sm:$0xff] %v2207
    %2212 = vst [vmem:[#allocation8 + $0x18] sm:$0xff] %v2208
    // Predicated region
    $region42: #{_lambda_.1} parent=1 // pred_check
      _
    $region43: #{_lambda_.1} parent=1 // pred_check_branch
      %2214 = sbr.rel (0) target = $region45
    $region44: #{_lambda_.1} parent=1 // pred_region
      %s2216 = ssub.s32 512, 512
      %2217 = vsyncadd [#allocation4], %s2216
      %s2218 = sshll.u32 [#allocation8], 4
      %s2219 = int_to_ptr.vmem [resolvable:$true] %s2218
      %2224 = dma.vmem_to_hbm [thread:$0]  %s2219, 512, %s7, [#allocation4], 128, 128, 8
    $region45: #{_lambda_.1} parent=1 // pred_fallthru
      _
    // Predicated region
    $region46: #{_lambda_.1} parent=1 // pred_check
      _
    $region47: #{_lambda_.1} parent=1 // pred_check_branch
      %2226 = sbr.rel (0) target = $region49
    $region48: #{_lambda_.1} parent=1 // pred_region
      %2227 = dma.done [#allocation4], 512
    $region49: #{_lambda_.1} parent=1 // pred_fallthru
      _
    %2228 = vsyncpa [#allocation3], 1
    %2229 = vsyncpa [#allocation6], 1
    %2230 = vsyncpa [#allocation4], 1

</llo_original>
